<compile_context>
chip_gen: v5e
topology: v5e:2x2
jax: 0.10.0
libtpu: 0.0.40
codegen_flags: <defaults>
</compile_context>

<pallas_src>
import functools

import jax
import jax.numpy as jnp
from jax.experimental import pallas as pl
from jax.experimental.pallas import tpu as pltpu


def _round_up(x, m):
    return ((x + m - 1) // m) * m


def _build_step_tables(counts2d, starts2d, *, T, M, P, tpp, S):
    """Flatten the non-empty (tile, expert) pairs of each tile-partition into
    static-length step tables (length S per partition, dummies at the end)."""
    present = counts2d > 0                                            # [T, M]
    first2d = jnp.logical_and(
        present, jnp.cumsum(present.astype(jnp.int32), axis=1) == 1)  # first expert of tile

    tiles_l, experts_l, counts_l, row0_l, first_l = [], [], [], [], []
    for p in range(P):
        t_lo = p * tpp
        t_hi = min((p + 1) * tpp, T)
        tp = t_hi - t_lo
        pres = present[t_lo:t_hi].reshape(-1)                         # [tp*M]
        rank = jnp.cumsum(pres.astype(jnp.int32)) - 1                 # pack order
        slot = jnp.where(pres, rank, S)                               # OOB -> dropped
        tt = (jnp.arange(tp * M, dtype=jnp.int32) // M) + t_lo
        mm = jnp.arange(tp * M, dtype=jnp.int32) % M
        n_real = jnp.sum(pres.astype(jnp.int32))

        # Dummy steps keep the partition's last tile resident (single writeback)
        tiles_p = jnp.full((S,), t_hi - 1, jnp.int32).at[slot].set(tt, mode="drop")
        exp_s = jnp.zeros((S,), jnp.int32).at[slot].set(mm, mode="drop")
        # Forward-fill the expert for dummy steps -> W block index unchanged,
        # so no weight DMA is issued for them.
        last_e = exp_s[jnp.maximum(n_real - 1, 0)]
        pos = jnp.arange(S, dtype=jnp.int32)
        experts_p = jnp.where(pos < n_real, exp_s, last_e)
        counts_p = jnp.zeros((S,), jnp.int32).at[slot].set(
            counts2d[t_lo:t_hi].reshape(-1).astype(jnp.int32), mode="drop")
        row0_p = jnp.zeros((S,), jnp.int32).at[slot].set(
            starts2d[t_lo:t_hi].reshape(-1).astype(jnp.int32), mode="drop")
        first_p = jnp.zeros((S,), jnp.int32).at[slot].set(
            first2d[t_lo:t_hi].reshape(-1).astype(jnp.int32), mode="drop")

        tiles_l.append(tiles_p)
        experts_l.append(experts_p)
        counts_l.append(counts_p)
        row0_l.append(row0_p)
        first_l.append(first_p)

    cat = lambda xs: jnp.concatenate(xs, axis=0)
    return cat(tiles_l), cat(experts_l), cat(counts_l), cat(row0_l), cat(first_l)


@functools.partial(jax.jit, static_argnames=("row_tile", "col_tile", "num_partitions"))
def module_selector_forward(in_feats, module_ids, weights, biases, *,
                            row_tile=512, col_tile=512, num_partitions=2):
    """
    Args:
      in_feats:   f32[num_feats, in_feat_size]
      module_ids: i32[num_feats]
      weights:    bf16 (preferred, persisted by caller) or f32
                  [num_modules, in_feat_size, out_feat_size]
      biases:     f32[num_modules, out_feat_size]
    Returns:
      f32[num_feats, out_feat_size]
    """
    num_feats, in_size = in_feats.shape
    M, w_in, out_size = weights.shape
    assert w_in == in_size

    # Callers should persist bf16 weights outside the jit; cast only as fallback.
    if weights.dtype != jnp.bfloat16:
        weights = weights.astype(jnp.bfloat16)
    biases = biases.astype(jnp.float32)

    # Row tile: multiple of 8 sublanes, default 512 rows.
    tm = min(row_tile, _round_up(num_feats, 8))
    n_pad = _round_up(num_feats, tm)
    T = n_pad // tm

    # Output-column tile (weight N-tiling) to bound per-expert W block VMEM.
    if out_size > col_tile and out_size % col_tile == 0:
        tn = col_tile
    else:
        tn = out_size
    J = out_size // tn

    ids = module_ids.astype(jnp.int32)
    x = in_feats
    pad = n_pad - num_feats
    if pad:
        x = jnp.pad(x, ((0, pad), (0, 0)))
        ids = jnp.pad(ids, (0, pad), constant_values=M)   # never matches any module

    # --- grouped-matmul prep: sort rows by module id ---------------------------
    order = jnp.argsort(ids)
    ids_sorted = ids[order]
    x_bf16 = x[order].astype(jnp.bfloat16)                # cast fuses with the gather

    # --- per-(tile, module) row ranges from global sorted boundaries -----------
    m_range = jnp.arange(M, dtype=jnp.int32)
    gs = jnp.searchsorted(ids_sorted, m_range, side="left").astype(jnp.int32)
    ge = jnp.searchsorted(ids_sorted, m_range, side="right").astype(jnp.int32)
    tile_lo = (jnp.arange(T, dtype=jnp.int32) * tm)[:, None]
    counts2d = jnp.clip(jnp.minimum(ge[None, :], tile_lo + tm)
                        - jnp.maximum(gs[None, :], tile_lo), 0, tm)   # [T, M]
    starts2d = jnp.clip(gs[None, :] - tile_lo, 0, tm)                 # [T, M]

    # --- tile partitions (outer parallel axis for v7x megacore) ----------------
    P = max(1, min(num_partitions, T))
    tpp = -(-T // P)
    P = -(-T // tpp)                      # every partition owns >= 1 row tile
    S = tpp + M - 1                       # static bound on non-empty steps/partition

    step_tiles, step_experts, step_counts, step_row0, step_first = _build_step_tables(
        counts2d, starts2d, T=T, M=M, P=P, tpp=tpp, S=S)

    # Whole bias table as a single VMEM-resident input: row = expert*J + j.
    b2 = biases.reshape(M * J, tn)

    squeezed = pl.Squeezed() if hasattr(pl, "Squeezed") else None

    def kernel(tiles_ref, experts_ref, counts_ref, row0_ref, first_ref,
               x_ref, w_ref, b_ref, o_ref):
        p = pl.program_id(0)
        j = pl.program_id(1)
        s = pl.program_id(2)
        step = p * S + s
        cnt = counts_ref[step]

        # Zero-init the resident output tile only when needed (boundary tiles);
        # wholly-owned tiles go through the full-store fast path below.
        @pl.when(jnp.logical_and(first_ref[step] == 1, cnt < tm))
        def _init():
            o_ref[...] = jnp.zeros_like(o_ref)

        @pl.when(cnt > 0)
        def _compute():
            e = experts_ref[step]
            # bf16 x bf16 on the MXU with f32 accumulation.
            y = jnp.dot(x_ref[...], w_ref[...], preferred_element_type=jnp.float32)
            y = y + b_ref[pl.ds(e * J + j, 1), :]          # (tm,tn)+(1,tn)

            @pl.when(cnt == tm)                            # tile wholly owned
            def _full():
                o_ref[...] = y

            @pl.when(cnt < tm)                             # boundary tile
            def _masked():
                row0 = row0_ref[step]
                rows = jax.lax.broadcasted_iota(jnp.int32, (tm, 1), 0)
                mask = jnp.logical_and(rows >= row0, rows < row0 + cnt)
                o_ref[...] = jnp.where(mask, y, o_ref[...])

    x_spec = pl.BlockSpec(
        (tm, in_size),
        lambda p, j, s, tl, ex, ct, r0, fr: (tl[p * S + s], 0))
    w_spec = pl.BlockSpec(
        (squeezed, in_size, tn),
        lambda p, j, s, tl, ex, ct, r0, fr: (ex[p * S + s], 0, j))
    b_spec = pl.BlockSpec(memory_space=pltpu.MemorySpace.VMEM)
    o_spec = pl.BlockSpec(
        (tm, tn),
        lambda p, j, s, tl, ex, ct, r0, fr: (tl[p * S + s], j))

    # Explicit VMEM budget: double-buffered x/W/out blocks + resident biases.
    est = (2 * tm * in_size * 2 + 2 * in_size * tn * 2
           + 2 * tm * tn * 4 + M * J * tn * 4)
    vmem_limit = int(min(max(2 * est, 32 * 1024 * 1024), 64 * 1024 * 1024))

    out_sorted = pl.pallas_call(
        kernel,
        out_shape=jax.ShapeDtypeStruct((n_pad, out_size), jnp.float32),
        grid_spec=pltpu.PrefetchScalarGridSpec(
            num_scalar_prefetch=5,               # tiles, experts, counts, row0, first
            grid=(P, J, S),
            in_specs=[x_spec, w_spec, b_spec],
            out_specs=o_spec,
        ),
        compiler_params=pltpu.CompilerParams(
            dimension_semantics=("parallel", "parallel", "arbitrary"),
            vmem_limit_bytes=vmem_limit,
        ),
    )(step_tiles, step_experts, step_counts, step_row0, step_first,
      x_bf16, weights, b2)

    # Undo the sort with an O(N) scatter (padded sorted rows are dropped).
    out = jnp.zeros((num_feats, out_size), jnp.float32).at[order].set(
        out_sorted, mode="drop")
    # Rows matching no module stay zero (mirrors the PyTorch masked assignment).
    valid = jnp.logical_and(module_ids >= 0, module_ids < M)
    return jnp.where(valid[:, None], out, 0.0)


if __name__ == "__main__":
    key = jax.random.PRNGKey(0)
    # Small but lane-dense shapes (feature dims multiple of 128, rows mult. of 8).
    num_feats = 1536
    in_feat_size = 128
    out_feat_size = 128
    num_modules = 4

    k1, k2, k3, k4 = jax.random.split(key, 4)
    in_feats = jax.random.normal(k1, (num_feats, in_feat_size), dtype=jnp.float32)
    weights = jax.random.normal(
        k2, (num_modules, in_feat_size, out_feat_size), dtype=jnp.float32) * 0.1
    biases = jax.random.normal(k3, (num_modules, out_feat_size), dtype=jnp.float32) * 0.1
    module_ids = jax.random.randint(k4, (num_feats,), 0, num_modules, dtype=jnp.int32)

    # Persist bf16 weights outside the jit (no per-call recast HBM pass).
    w_bf16 = weights.astype(jnp.bfloat16)

    def reference(ids):
        x_r = in_feats.astype(jnp.bfloat16).astype(jnp.float32)
        w_r = w_bf16.astype(jnp.float32)
        ref = jnp.zeros((num_feats, out_feat_size), dtype=jnp.float32)
        for m in range(num_modules):
            y = x_r @ w_r[m] + biases[m]
            ref = jnp.where((ids == m)[:, None], y, ref)
        return ref

    # Main run: random ids -> boundary tiles exercise the masked merge path.
    out = module_selector_forward(in_feats, module_ids, w_bf16, biases)
    out = jax.block_until_ready(out)
    assert out.shape == (num_feats, out_feat_size)
    assert jnp.allclose(out, reference(module_ids), atol=1e-2, rtol=1e-2), \
        "mismatch vs reference (random ids)"

    # Second check: block-constant ids -> wholly-owned tiles exercise the
    # cnt == tm fast path (same compiled kernel, same shapes).
    ids2 = (jnp.arange(num_feats, dtype=jnp.int32) // 512) % num_modules
    out2 = jax.block_until_ready(
        module_selector_forward(in_feats, ids2, w_bf16, biases))
    assert jnp.allclose(out2, reference(ids2), atol=1e-2, rtol=1e-2), \
        "mismatch vs reference (block-constant ids)"

    print("KERNEL_OK")
</pallas_src>

<mosaic_0001>
module attributes {stable_mosaic.version = 11 : i64} {
  func.func @kernel(%arg0: i32, %arg1: i32, %arg2: i32, %arg3: memref<10xi32, #tpu.memory_space<smem>>, %arg4: memref<10xi32, #tpu.memory_space<smem>>, %arg5: memref<10xi32, #tpu.memory_space<smem>>, %arg6: memref<10xi32, #tpu.memory_space<smem>>, %arg7: memref<10xi32, #tpu.memory_space<smem>>, %arg8: memref<512x128xbf16, #tpu.memory_space<vmem>>, %arg9: memref<1x128x128xbf16, #tpu.memory_space<vmem>>, %arg10: memref<4x128xf32, #tpu.memory_space<vmem>>, %arg11: memref<512x128xf32, #tpu.memory_space<vmem>>) attributes {dimension_semantics = [#tpu.dimension_semantics<parallel>, #tpu.dimension_semantics<parallel>, #tpu.dimension_semantics<arbitrary>], iteration_bounds = array<i64: 2, 1, 5>, scalar_prefetch = 5 : i64, scratch_operands = 0 : i64, tpu.core_type = #tpu.core_type<tc>, window_params = [{transform_indices = @transform_0, window_bounds = array<i64: 512, 128>}, {transform_indices = @transform_1, window_bounds = array<i64: 1, 128, 128>}, {pipeline_mode = #tpu.pipeline_mode<synchronous>, transform_indices = @transform_2, window_bounds = array<i64: 4, 128>}, {transform_indices = @transform_3, window_bounds = array<i64: 512, 128>}]} {
    %c5_i32 = arith.constant 5 : i32
    %0 = arith.muli %arg0, %c5_i32 : i32
    %1 = arith.addi %0, %arg2 : i32
    %2 = arith.index_cast %1 : i32 to index
    %3 = memref.load %arg5[%2] : memref<10xi32, #tpu.memory_space<smem>>
    %4 = arith.index_cast %1 : i32 to index
    %5 = memref.load %arg7[%4] : memref<10xi32, #tpu.memory_space<smem>>
    %c1_i32 = arith.constant 1 : i32
    %6 = arith.cmpi eq, %5, %c1_i32 : i32
    %c512_i32 = arith.constant 512 : i32
    %7 = arith.cmpi slt, %3, %c512_i32 : i32
    %8 = arith.andi %6, %7 : i1
    %9 = arith.extui %8 : i1 to i32
    %c0_i32 = arith.constant 0 : i32
    %10 = arith.cmpi ne, %9, %c0_i32 : i32
    scf.if %10 {
      %cst = arith.constant 0.000000e+00 : f32
      %14 = vector.broadcast %cst : f32 to vector<512x128xf32>
      %c0 = arith.constant 0 : index
      %c0_2 = arith.constant 0 : index
      %15 = vector.load %arg11[%c0, %c0_2] : memref<512x128xf32, #tpu.memory_space<vmem>>, vector<512x128xf32>
      tpu.vector_store %arg11[%c0, %c0_2], %14 {strides = array<i32>} : memref<512x128xf32, #tpu.memory_space<vmem>>, vector<512x128xf32>,
    } else {
    }
    %c0_i32_0 = arith.constant 0 : i32
    %11 = arith.cmpi sgt, %3, %c0_i32_0 : i32
    %12 = arith.extui %11 : i1 to i32
    %c0_i32_1 = arith.constant 0 : i32
    %13 = arith.cmpi ne, %12, %c0_i32_1 : i32
    scf.if %13 {
      %14 = arith.index_cast %1 : i32 to index
      %15 = memref.load %arg4[%14] : memref<10xi32, #tpu.memory_space<smem>>
      %c0 = arith.constant 0 : index
      %c0_2 = arith.constant 0 : index
      %16 = vector.load %arg8[%c0, %c0_2] : memref<512x128xbf16, #tpu.memory_space<vmem>>, vector<512x128xbf16>
      %c0_3 = arith.constant 0 : index
      %c0_4 = arith.constant 0 : index
      %c0_5 = arith.constant 0 : index
      %17 = vector.load %arg9[%c0_3, %c0_4, %c0_5] : memref<1x128x128xbf16, #tpu.memory_space<vmem>>, vector<1x128x128xbf16>
      %18 = vector.shape_cast %17 : vector<1x128x128xbf16> to vector<128x128xbf16>
      %cst = arith.constant dense<0.000000e+00> : vector<512x128xf32>
      %19 = tpu.matmul %16, %18, %cst {dimension_numbers = #tpu.dot_dimension_numbers<[1], [0], [0], [1], [0, 0, 1, 1], [], []>} : vector<512x128xbf16>, vector<128x128xbf16>, vector<512x128xf32> -> vector<512x128xf32>
      %c1_i32_6 = arith.constant 1 : i32
      %20 = arith.muli %15, %c1_i32_6 : i32
      %21 = arith.addi %20, %arg1 : i32
      %22 = arith.index_cast %21 : i32 to index
      %c0_7 = arith.constant 0 : index
      %23 = vector.load %arg10[%22, %c0_7] : memref<4x128xf32, #tpu.memory_space<vmem>>, vector<1x128xf32>
      %24 = vector.broadcast %23 : vector<1x128xf32> to vector<512x128xf32>
      %25 = arith.addf %19, %24 : vector<512x128xf32>
      %c512_i32_8 = arith.constant 512 : i32
      %26 = arith.cmpi eq, %3, %c512_i32_8 : i32
      %27 = arith.extui %26 : i1 to i32
      %c0_i32_9 = arith.constant 0 : i32
      %28 = arith.cmpi ne, %27, %c0_i32_9 : i32
      scf.if %28 {
        %c0_12 = arith.constant 0 : index
        %c0_13 = arith.constant 0 : index
        %32 = vector.load %arg11[%c0_12, %c0_13] : memref<512x128xf32, #tpu.memory_space<vmem>>, vector<512x128xf32>
        tpu.vector_store %arg11[%c0_12, %c0_13], %25 {strides = array<i32>} : memref<512x128xf32, #tpu.memory_space<vmem>>, vector<512x128xf32>,
      } else {
      }
      %c512_i32_10 = arith.constant 512 : i32
      %29 = arith.cmpi slt, %3, %c512_i32_10 : i32
      %30 = arith.extui %29 : i1 to i32
      %c0_i32_11 = arith.constant 0 : i32
      %31 = arith.cmpi ne, %30, %c0_i32_11 : i32
      scf.if %31 {
        %32 = arith.index_cast %1 : i32 to index
        %33 = memref.load %arg6[%32] : memref<10xi32, #tpu.memory_space<smem>>
        %34 = tpu.iota {dimensions = array<i32: 0>} : vector<512x1xi32>
        %35 = vector.broadcast %33 : i32 to vector<512x1xi32>
        %36 = arith.cmpi sge, %34, %35 : vector<512x1xi32>
        %37 = arith.addi %33, %3 : i32
        %38 = vector.broadcast %37 : i32 to vector<512x1xi32>
        %39 = arith.cmpi slt, %34, %38 : vector<512x1xi32>
        %40 = arith.andi %36, %39 : vector<512x1xi1>
        %c0_12 = arith.constant 0 : index
        %c0_13 = arith.constant 0 : index
        %41 = vector.load %arg11[%c0_12, %c0_13] : memref<512x128xf32, #tpu.memory_space<vmem>>, vector<512x128xf32>
        %42 = vector.shape_cast %40 : vector<512x1xi1> to vector<512x1xi1>
        %43 = vector.broadcast %42 : vector<512x1xi1> to vector<512x128xi1>
        %44 = arith.select %43, %25, %41 : vector<512x128xi1>, vector<512x128xf32>
        %c0_14 = arith.constant 0 : index
        %c0_15 = arith.constant 0 : index
        %45 = vector.load %arg11[%c0_14, %c0_15] : memref<512x128xf32, #tpu.memory_space<vmem>>, vector<512x128xf32>
        tpu.vector_store %arg11[%c0_14, %c0_15], %44 {strides = array<i32>} : memref<512x128xf32, #tpu.memory_space<vmem>>, vector<512x128xf32>,
      } else {
      }
    } else {
    }
    return
  }
  func.func @transform_0(%arg0: i32, %arg1: i32, %arg2: i32, %arg3: memref<10xi32, #tpu.memory_space<smem>>, %arg4: memref<10xi32, #tpu.memory_space<smem>>, %arg5: memref<10xi32, #tpu.memory_space<smem>>, %arg6: memref<10xi32, #tpu.memory_space<smem>>, %arg7: memref<10xi32, #tpu.memory_space<smem>>) -> (i32, i32) {
    %c5_i32 = arith.constant 5 : i32
    %0 = arith.muli %arg0, %c5_i32 : i32
    %1 = arith.addi %0, %arg2 : i32
    %2 = arith.index_cast %1 : i32 to index
    %3 = memref.load %arg3[%2] : memref<10xi32, #tpu.memory_space<smem>>
    %c0_i32 = arith.constant 0 : i32
    %c0_i32_0 = arith.constant 0 : i32
    return %3, %c0_i32 : i32, i32
  }
  func.func @transform_1(%arg0: i32, %arg1: i32, %arg2: i32, %arg3: memref<10xi32, #tpu.memory_space<smem>>, %arg4: memref<10xi32, #tpu.memory_space<smem>>, %arg5: memref<10xi32, #tpu.memory_space<smem>>, %arg6: memref<10xi32, #tpu.memory_space<smem>>, %arg7: memref<10xi32, #tpu.memory_space<smem>>) -> (i32, i32, i32) {
    %c5_i32 = arith.constant 5 : i32
    %0 = arith.muli %arg0, %c5_i32 : i32
    %1 = arith.addi %0, %arg2 : i32
    %2 = arith.index_cast %1 : i32 to index
    %3 = memref.load %arg4[%2] : memref<10xi32, #tpu.memory_space<smem>>
    %c0_i32 = arith.constant 0 : i32
    %c0_i32_0 = arith.constant 0 : i32
    return %3, %c0_i32, %arg1 : i32, i32, i32
  }
  func.func @transform_2(%arg0: i32, %arg1: i32, %arg2: i32, %arg3: memref<10xi32, #tpu.memory_space<smem>>, %arg4: memref<10xi32, #tpu.memory_space<smem>>, %arg5: memref<10xi32, #tpu.memory_space<smem>>, %arg6: memref<10xi32, #tpu.memory_space<smem>>, %arg7: memref<10xi32, #tpu.memory_space<smem>>) -> (i32, i32) {
    %c0_i32 = arith.constant 0 : i32
    %c0_i32_0 = arith.constant 0 : i32
    %c0_i32_1 = arith.constant 0 : i32
    return %c0_i32, %c0_i32_0 : i32, i32
  }
  func.func @transform_3(%arg0: i32, %arg1: i32, %arg2: i32, %arg3: memref<10xi32, #tpu.memory_space<smem>>, %arg4: memref<10xi32, #tpu.memory_space<smem>>, %arg5: memref<10xi32, #tpu.memory_space<smem>>, %arg6: memref<10xi32, #tpu.memory_space<smem>>, %arg7: memref<10xi32, #tpu.memory_space<smem>>) -> (i32, i32) {
    %c5_i32 = arith.constant 5 : i32
    %0 = arith.muli %arg0, %c5_i32 : i32
    %1 = arith.addi %0, %arg2 : i32
    %2 = arith.index_cast %1 : i32 to index
    %3 = memref.load %arg3[%2] : memref<10xi32, #tpu.memory_space<smem>>
    %c0_i32 = arith.constant 0 : i32
    return %3, %arg1 : i32, i32
  }
}

</mosaic_0001>

<llo_original>
// kernel: custom-call
$region0: #{custom-call}
  %s0 = inlined_call_operand.vmem [shape: u32[4], index: 0, kind: output, shape index: {}]

// kernel: module_selector_forward.1
$region0: #{module_selector_forward.1}
  #allocation0 [shape = 'u32[]', space=smem, size = 0x4, offset = 0x4, fixed_abs, tag = 'smem constant byte address 0x4 - core index']
  #allocation1 [shape = 'u32[72,128]{1,0:T(1,128)}', space=vmem, size = 0x9000, scoped, tag = 'internal scratch']
  #allocation2 [shape = 's32[1]{0}', space=sflag, size = 0x4, scoped, tag = 'scoped memory for module_selector_forward.1']
  #allocation3 [shape = 'u8[512]{0}', space=smem, size = 0x200, scoped, tag = 'prefetched SMEM operand 0']
  #allocation4 [shape = 'u8[512]{0}', space=smem, size = 0x200, scoped, tag = 'prefetched SMEM operand 1']
  #allocation5 [shape = 'u8[512]{0}', space=smem, size = 0x200, scoped, tag = 'prefetched SMEM operand 2']
  #allocation6 [shape = 'u8[512]{0}', space=smem, size = 0x200, scoped, tag = 'prefetched SMEM operand 3']
  #allocation7 [shape = 'u8[512]{0}', space=smem, size = 0x200, scoped, tag = 'prefetched SMEM operand 4']
  %s0 = inlined_call_operand.vmem [shape: s32[10], index: 0, kind: input, shape index: {}]
  %s1 = inlined_call_operand.vmem [shape: s32[10], index: 1, kind: input, shape index: {}]
  %s2 = inlined_call_operand.vmem [shape: s32[10], index: 2, kind: input, shape index: {}]
  %s3 = inlined_call_operand.vmem [shape: s32[10], index: 3, kind: input, shape index: {}]
  %s4 = inlined_call_operand.vmem [shape: s32[10], index: 4, kind: input, shape index: {}]
  %s5 = inlined_call_operand.vmem [shape: bf16[1536,128], index: 5, kind: input, shape index: {}]
  %s6 = inlined_call_operand.vmem [shape: bf16[4,128,128], index: 6, kind: input, shape index: {}]
  %s7 = inlined_call_operand.vmem [shape: f32[4,128], index: 7, kind: input, shape index: {}]
  %s8 = inlined_call_operand.vmem [shape: f32[1536,128], index: 8, kind: output, shape index: {}]
  %s9 = sld [smem:[#allocation0]]
  $region61: #{module_selector_forward.1} parent=0
    _
  %s11 = ssub.s32 1, %s9
  %s12 = scalar_select 0, %s11, %s9
  %s14 = sshll.u32 %s0, 4
  %s15 = int_to_ptr.vmem [resolvable:$true] %s14
  %17 = dma.vmem_to_smem %s15, 16, [#allocation3], [#allocation2]
  %s19 = sshll.u32 %s1, 4
  %s20 = int_to_ptr.vmem [resolvable:$true] %s19
  %22 = dma.vmem_to_smem %s20, 16, [#allocation4], [#allocation2]
  %s24 = sshll.u32 %s2, 4
  %s25 = int_to_ptr.vmem [resolvable:$true] %s24
  %27 = dma.vmem_to_smem %s25, 16, [#allocation5], [#allocation2]
  %s29 = sshll.u32 %s3, 4
  %s30 = int_to_ptr.vmem [resolvable:$true] %s29
  %32 = dma.vmem_to_smem %s30, 16, [#allocation6], [#allocation2]
  %s34 = sshll.u32 %s4, 4
  %s35 = int_to_ptr.vmem [resolvable:$true] %s34
  %37 = dma.vmem_to_smem %s35, 16, [#allocation7], [#allocation2]
  %39 = dma.done [#allocation2], 80
  %40 = sfence
  loop: start=0, step=1, limit=12
  $region2: #{module_selector_forward.1} parent=0 // loop_pre_header
    _
  $region3: #{module_selector_forward.1} parent=0 // loop_header
    %s42 = sphi 0, %s46
    %p43 = scmp.ge.s32.totalorder %s42, 12
    %s49 = sphi 0, %s68
    %s50 = sphi 0, %s64
    %s51 = sphi 0, %s60
    %s52 = sphi 0, %s49
    %s53 = sphi 0, %s50
    %s54 = sphi 0, %s51
    %s55 = sphi 0, %s52
    %s56 = sphi 0, %s53
    %s57 = sphi 0, %s54
    %s77 = sphi 0, %s79
    %s80 = sphi 0, %s77
    %s81 = sphi 0, %s80
    %s97 = sphi 0, %s81
    %s111 = sphi 0, %s113
    %s114 = sphi 0, %s111
    %s115 = sphi 0, %s114
    %s131 = sphi 0, %s115
    %s135 = sphi 0, %s135
    %s137 = sphi 0, %s135
    %s138 = sphi 0, %s137
    %s152 = sphi 0, %s138
    %s166 = sphi 0, %s168
    %s169 = sphi 0, %s166
    %s170 = sphi 0, %s169
    %s186 = sphi 0, %s170
  $region4: #{module_selector_forward.1} parent=0 // loop_header_branch
    %45 = sbr.rel (%p43) target = $region8
  $region5: #{module_selector_forward.1} parent=0 // loop_body
    %s47 = ssub.s32 %s42, 1
    %s48 = ssub.s32 %s42, 2
    %s58 = sadd.s32 1, %s51
    %p59 = scmp.ge.s32.totalorder %s58, 5
    %s60 = scalar_select %p59, 0, %s58
    %s61 = sadd.s32 1, %s50
    %s62 = scalar_select %p59, %s61, %s50
    %p63 = scmp.ge.s32.totalorder %s62, 1
    %s64 = scalar_select %p63, 0, %s62
    %s65 = sadd.s32 1, %s49
    %s66 = scalar_select %p63, %s65, %s49
    %p67 = scmp.ge.s32.totalorder %s66, 2
    %s68 = scalar_select %p67, 0, %s66
    %s69 = smul.u32 %s49, 5
    %s70 = sadd.s32 %s69, %s51
    %s71 = sld [smem:[#allocation3 + %s70]]
    %s72 = smul.u32 %s68, 5
    %s73 = sadd.s32 %s72, %s60
    %s74 = sld [smem:[#allocation3 + %s73]]
    %s75 = ssub.s32 %s71, %s74
    %p76 = scmp.eq.s32.totalorder %s75, 0
    %s78 = sadd.s32 %s77, 1
    %s79 = scalar_select %p76, %s77, %s78
    %p82 = pneg %p76
    %p83 = scmp.eq.s32.totalorder %s42, 9
    %p84 = por %p82, %p83
    %p85 = scmp.ne.s32.totalorder %s77, %s80
    %p86 = scmp.eq.s32.totalorder %s42, 0
    %p87 = por %p85, %p86
    %p88 = scmp.ne.s32.totalorder %s77, %s80
    %p89 = scmp.eq.s32.totalorder %s47, 9
    %p90 = por %p88, %p89
    %p91 = scmp.ne.s32.totalorder %s80, %s81
    %p92 = scmp.eq.s32.totalorder %s47, 0
    %p93 = por %p91, %p92
    %p94 = scmp.ne.s32.totalorder %s80, %s81
    %p95 = scmp.eq.s32.totalorder %s48, 9
    %p96 = por %p94, %p95
    %p98 = scmp.ne.s32.totalorder %s81, %s97
    %p99 = scmp.eq.s32.totalorder %s48, 0
    %p100 = por %p98, %p99
    %s101 = smul.u32 %s49, 5
    %s102 = sadd.s32 %s101, %s51
    %s103 = sld [smem:[#allocation4 + %s102]]
    %s104 = smul.u32 %s68, 5
    %s105 = sadd.s32 %s104, %s60
    %s106 = sld [smem:[#allocation4 + %s105]]
    %s107 = ssub.s32 %s103, %s106
    %s108 = ssub.s32 %s50, %s64
    %s109 = sor.u32 %s107, %s108
    %p110 = scmp.eq.s32.totalorder %s109, 0
    %s112 = sadd.s32 %s111, 1
    %s113 = scalar_select %p110, %s111, %s112
    %p116 = pneg %p110
    %p117 = scmp.eq.s32.totalorder %s42, 9
    %p118 = por %p116, %p117
    %p119 = scmp.ne.s32.totalorder %s111, %s114
    %p120 = scmp.eq.s32.totalorder %s42, 0
    %p121 = por %p119, %p120
    %p122 = scmp.ne.s32.totalorder %s111, %s114
    %p123 = scmp.eq.s32.totalorder %s47, 9
    %p124 = por %p122, %p123
    %p125 = scmp.ne.s32.totalorder %s114, %s115
    %p126 = scmp.eq.s32.totalorder %s47, 0
    %p127 = por %p125, %p126
    %p128 = scmp.ne.s32.totalorder %s114, %s115
    %p129 = scmp.eq.s32.totalorder %s48, 9
    %p130 = por %p128, %p129
    %p132 = scmp.ne.s32.totalorder %s115, %s131
    %p133 = scmp.eq.s32.totalorder %s48, 0
    %p134 = por %p132, %p133
    %s136 = sadd.s32 %s135, 1
    %p139 = scmp.eq.s32.totalorder %s42, 9
    %p140 = scmp.ne.s32.totalorder %s135, %s137
    %p141 = scmp.eq.s32.totalorder %s42, 0
    %p142 = por %p140, %p141
    %p143 = scmp.ne.s32.totalorder %s135, %s137
    %p144 = scmp.eq.s32.totalorder %s47, 9
    %p145 = por %p143, %p144
    %p146 = scmp.ne.s32.totalorder %s137, %s138
    %p147 = scmp.eq.s32.totalorder %s47, 0
    %p148 = por %p146, %p147
    %p149 = scmp.ne.s32.totalorder %s137, %s138
    %p150 = scmp.eq.s32.totalorder %s48, 9
    %p151 = por %p149, %p150
    %p153 = scmp.ne.s32.totalorder %s138, %s152
    %p154 = scmp.eq.s32.totalorder %s48, 0
    %p155 = por %p153, %p154
    %s156 = smul.u32 %s49, 5
    %s157 = sadd.s32 %s156, %s51
    %s158 = sld [smem:[#allocation3 + %s157]]
    %s159 = smul.u32 %s68, 5
    %s160 = sadd.s32 %s159, %s60
    %s161 = sld [smem:[#allocation3 + %s160]]
    %s162 = ssub.s32 %s158, %s161
    %s163 = ssub.s32 %s50, %s64
    %s164 = sor.u32 %s162, %s163
    %p165 = scmp.eq.s32.totalorder %s164, 0
    %s167 = sadd.s32 %s166, 1
    %s168 = scalar_select %p165, %s166, %s167
    %p171 = pneg %p165
    %p172 = scmp.eq.s32.totalorder %s42, 9
    %p173 = por %p171, %p172
    %p174 = scmp.ne.s32.totalorder %s166, %s169
    %p175 = scmp.eq.s32.totalorder %s42, 0
    %p176 = por %p174, %p175
    %p177 = scmp.ne.s32.totalorder %s166, %s169
    %p178 = scmp.eq.s32.totalorder %s47, 9
    %p179 = por %p177, %p178
    %p180 = scmp.ne.s32.totalorder %s169, %s170
    %p181 = scmp.eq.s32.totalorder %s47, 0
    %p182 = por %p180, %p181
    %p183 = scmp.ne.s32.totalorder %s169, %s170
    %p184 = scmp.eq.s32.totalorder %s48, 9
    %p185 = por %p183, %p184
    %p187 = scmp.ne.s32.totalorder %s170, %s186
    %p188 = scmp.eq.s32.totalorder %s48, 0
    %p189 = por %p187, %p188
    %p190 = scmp.le.s32.totalorder 1, %s42
    %p191 = scmp.lt.s32.totalorder %s42, 11
    %p192 = pnand %p190, %p191
    %p193 = pneg %p192
    // Predicated region
    $region9: #{module_selector_forward.1} parent=5 // pred_check
      _
    $region10: #{module_selector_forward.1} parent=5 // pred_check_branch
      %195 = sbr.rel (%p192) target = $region12
    $region11: #{module_selector_forward.1} parent=5 // pred_region
      %s196 = ssub.s32 %s42, 1
      // Predicated region
      $region13: #{module_selector_forward.1} parent=11 // pred_check
        %p197 = pneg %p148
      $region14: #{module_selector_forward.1} parent=11 // pred_check_branch
        %199 = sbr.rel (%p197) target = $region16
      $region15: #{module_selector_forward.1} parent=11 // pred_region
        _
      $region16: #{module_selector_forward.1} parent=11 // pred_fallthru
        _
    $region12: #{module_selector_forward.1} parent=5 // pred_fallthru
      _
    %p200 = scmp.lt.s32.totalorder %s42, 10
    // Predicated region
    $region17: #{module_selector_forward.1} parent=5 // pred_check
      %p201 = pneg %p200
    $region18: #{module_selector_forward.1} parent=5 // pred_check_branch
      %203 = sbr.rel (%p201) target = $region20
    $region19: #{module_selector_forward.1} parent=5 // pred_region
      // Predicated region
      $region21: #{module_selector_forward.1} parent=19 // pred_check
        %p204 = pneg %p87
      $region22: #{module_selector_forward.1} parent=19 // pred_check_branch
        %206 = sbr.rel (%p204) target = $region24
      $region23: #{module_selector_forward.1} parent=19 // pred_region
        %s207 = smul.u32 %s49, 5
        %s208 = sadd.s32 %s207, %s51
        %s209 = sld [smem:[#allocation3 + %s208]]
        %s210 = smul.u32 64, %s209
        %p211 = scmp.lt.s32.totalorder %s210, 191
        %s212 = scalar_select %p211, %s210, 191
        %s213 = smul.addr %s212, 4
        %s214 = scalar_lea.vmem %s5, %s213
        %s215 = smul.u32 %s49, 5
        %s216 = sadd.s32 %s215, %s51
        %s217 = sld [smem:[#allocation3 + %s216]]
        %s218 = smul.u32 64, %s217
      $region24: #{module_selector_forward.1} parent=19 // pred_fallthru
        _
      // Predicated region
      $region25: #{module_selector_forward.1} parent=19 // pred_check
        %p219 = pneg %p121
      $region26: #{module_selector_forward.1} parent=19 // pred_check_branch
        %221 = sbr.rel (%p219) target = $region28
      $region27: #{module_selector_forward.1} parent=19 // pred_region
        %s222 = smul.u32 %s49, 5
        %s223 = sadd.s32 %s222, %s51
        %s224 = sld [smem:[#allocation4 + %s223]]
        %p225 = scmp.lt.s32.totalorder %s224, 3
        %s226 = scalar_select %p225, %s224, 3
        %p227 = scmp.lt.s32.totalorder %s50, 0
        %s228 = scalar_select %p227, %s50, 0
        %s229 = smul.addr %s226, 16
        %s230 = sadd.s32 %s228, %s229
        %s231 = smul.addr %s230, 4
        %s232 = scalar_lea.vmem %s6, %s231
        %s233 = smul.u32 %s49, 5
        %s234 = sadd.s32 %s233, %s51
        %s235 = sld [smem:[#allocation4 + %s234]]
      $region28: #{module_selector_forward.1} parent=19 // pred_fallthru
        _
    $region20: #{module_selector_forward.1} parent=5 // pred_fallthru
      _
    %p236 = scmp.le.s32.totalorder 1, %s42
    %p237 = scmp.lt.s32.totalorder %s42, 11
    %p238 = pnand %p236, %p237
    %p239 = pneg %p238
    // Predicated region
    $region29: #{module_selector_forward.1} parent=5 // pred_check
      _
    $region30: #{module_selector_forward.1} parent=5 // pred_check_branch
      %241 = sbr.rel (%p238) target = $region32
    $region31: #{module_selector_forward.1} parent=5 // pred_region
      %s242 = ssub.s32 %s42, 1
      %s243 = smul.u32 %s52, 5
      %s244 = sadd.s32 %s243, %s54
      %s245 = sld [smem:[#allocation3 + %s244]]
      %s246 = smul.u32 64, %s245
      %p247 = scmp.lt.s32.totalorder %s246, 191
      %s248 = scalar_select %p247, %s246, 191
      %s249 = smul.addr %s248, 4
      %s250 = scalar_lea.vmem %s5, %s249
      %p251 = pneg %p93
      %p252 = pneg %p90
      %s253 = smul.u32 %s52, 5
      %s254 = sadd.s32 %s253, %s54
      %s255 = sld [smem:[#allocation4 + %s254]]
      %p256 = scmp.lt.s32.totalorder %s255, 3
      %s257 = scalar_select %p256, %s255, 3
      %p258 = scmp.lt.s32.totalorder %s53, 0
      %s259 = scalar_select %p258, %s53, 0
      %s260 = smul.addr %s257, 16
      %s261 = sadd.s32 %s259, %s260
      %s262 = smul.addr %s261, 4
      %s263 = scalar_lea.vmem %s6, %s262
      %p264 = pneg %p127
      %p265 = pneg %p124
      %p266 = pneg %p148
      %p267 = pneg %p145
      %p268 = pneg %p182
      %p269 = pneg %p179
      %s270 = smul.u32 %s52, 5
      %s271 = sadd.s32 %s270, %s54
      %s272 = sld [smem:[#allocation3 + %s271]]
      %s273 = smul.u32 64, %s272
      %p274 = scmp.lt.s32.totalorder %s273, 191
      %s275 = scalar_select %p274, %s273, 191
      %p276 = scmp.lt.s32.totalorder %s53, 0
      %s277 = scalar_select %p276, %s53, 0
      %s278 = sadd.s32 %s277, %s275
      %s279 = smul.addr %s278, 8
      %s280 = scalar_lea.vmem %s8, %s279
      %s281 = smul.u32 %s52, 5
      %s282 = sadd.s32 %s281, %s54
      %s283 = sld [smem:[#allocation3 + %s282]]
      %s284 = smul.u32 64, %s283
      %p285 = scmp.lt.s32.totalorder %s284, 191
      %s286 = scalar_select %p285, %s284, 191
      %s287 = smul.addr %s286, 4
      %s288 = scalar_lea.vmem %s5, %s287
      %s289 = smul.u32 %s52, 5
      %s290 = sadd.s32 %s289, %s54
      %s291 = sld [smem:[#allocation3 + %s290]]
      %s292 = smul.u32 64, %s291
      %s293 = smul.u32 %s52, 5
      %s294 = sadd.s32 %s293, %s54
      %s295 = sld [smem:[#allocation4 + %s294]]
      %p296 = scmp.lt.s32.totalorder %s295, 3
      %s297 = scalar_select %p296, %s295, 3
      %p298 = scmp.lt.s32.totalorder %s53, 0
      %s299 = scalar_select %p298, %s53, 0
      %s300 = smul.addr %s297, 16
      %s301 = sadd.s32 %s299, %s300
      %s302 = smul.addr %s301, 4
      %s303 = scalar_lea.vmem %s6, %s302
      %s304 = smul.u32 %s52, 5
      %s305 = sadd.s32 %s304, %s54
      %s306 = sld [smem:[#allocation4 + %s305]]
      %s307 = smul.u32 %s52, 5
      %s308 = sadd.s32 %s307, %s54
      %s309 = sld [smem:[#allocation3 + %s308]]
      %s310 = smul.u32 64, %s309
      %p311 = scmp.lt.s32.totalorder %s310, 191
      %s312 = scalar_select %p311, %s310, 191
      %p313 = scmp.lt.s32.totalorder %s53, 0
      %s314 = scalar_select %p313, %s53, 0
      %s315 = sadd.s32 %s314, %s312
      %s316 = smul.addr %s315, 8
      %s317 = scalar_lea.vmem %s8, %s316
      %s318 = smul.u32 %s52, 5
      %s319 = sadd.s32 %s318, %s54
      %s320 = sld [smem:[#allocation3 + %s319]]
      %s321 = smul.u32 64, %s320
      %s322 = smul.u32 %s52, 5
      %s323 = sadd.s32 %s322, %s54
      %s324 = sld [smem:[#allocation5 + %s323]]
      %s325 = sld [smem:[#allocation7 + %s323]]
      %p326 = scmp.eq.s32.totalorder %s325, 1
      %p327 = scmp.lt.s32.totalorder %s324, 512
      %p328 = pnand %p326, %p327
      %p329 = pneg %p328
      // Predicated region
      $region33: #{module_selector_forward.1} parent=31 // pred_check
        _
      $region34: #{module_selector_forward.1} parent=31 // pred_check_branch
        %331 = sbr.rel (%p328) target = $region36
      $region35: #{module_selector_forward.1} parent=31 // pred_region
        %332 = vst [vmem:[%s317] sm:$0xff] 0.0
        %333 = vst [vmem:[%s317 + $0x8] sm:$0xff] 0.0
        %334 = vst [vmem:[%s317 + $0x10] sm:$0xff] 0.0
        %335 = vst [vmem:[%s317 + $0x18] sm:$0xff] 0.0
        %336 = vst [vmem:[%s317 + $0x20] sm:$0xff] 0.0
        %337 = vst [vmem:[%s317 + $0x28] sm:$0xff] 0.0
        %338 = vst [vmem:[%s317 + $0x30] sm:$0xff] 0.0
        %339 = vst [vmem:[%s317 + $0x38] sm:$0xff] 0.0
        %340 = vst [vmem:[%s317 + $0x40] sm:$0xff] 0.0
        %341 = vst [vmem:[%s317 + $0x48] sm:$0xff] 0.0
        %342 = vst [vmem:[%s317 + $0x50] sm:$0xff] 0.0
        %343 = vst [vmem:[%s317 + $0x58] sm:$0xff] 0.0
        %344 = vst [vmem:[%s317 + $0x60] sm:$0xff] 0.0
        %345 = vst [vmem:[%s317 + $0x68] sm:$0xff] 0.0
        %346 = vst [vmem:[%s317 + $0x70] sm:$0xff] 0.0
        %347 = vst [vmem:[%s317 + $0x78] sm:$0xff] 0.0
        %348 = vst [vmem:[%s317 + $0x80] sm:$0xff] 0.0
        %349 = vst [vmem:[%s317 + $0x88] sm:$0xff] 0.0
        %350 = vst [vmem:[%s317 + $0x90] sm:$0xff] 0.0
        %351 = vst [vmem:[%s317 + $0x98] sm:$0xff] 0.0
        %352 = vst [vmem:[%s317 + $0xa0] sm:$0xff] 0.0
        %353 = vst [vmem:[%s317 + $0xa8] sm:$0xff] 0.0
        %354 = vst [vmem:[%s317 + $0xb0] sm:$0xff] 0.0
        %355 = vst [vmem:[%s317 + $0xb8] sm:$0xff] 0.0
        %356 = vst [vmem:[%s317 + $0xc0] sm:$0xff] 0.0
        %357 = vst [vmem:[%s317 + $0xc8] sm:$0xff] 0.0
        %358 = vst [vmem:[%s317 + $0xd0] sm:$0xff] 0.0
        %359 = vst [vmem:[%s317 + $0xd8] sm:$0xff] 0.0
        %360 = vst [vmem:[%s317 + $0xe0] sm:$0xff] 0.0
        %361 = vst [vmem:[%s317 + $0xe8] sm:$0xff] 0.0
        %362 = vst [vmem:[%s317 + $0xf0] sm:$0xff] 0.0
        %363 = vst [vmem:[%s317 + $0xf8] sm:$0xff] 0.0
        %364 = vst [vmem:[%s317 + $0x100] sm:$0xff] 0.0
        %365 = vst [vmem:[%s317 + $0x108] sm:$0xff] 0.0
        %366 = vst [vmem:[%s317 + $0x110] sm:$0xff] 0.0
        %367 = vst [vmem:[%s317 + $0x118] sm:$0xff] 0.0
        %368 = vst [vmem:[%s317 + $0x120] sm:$0xff] 0.0
        %369 = vst [vmem:[%s317 + $0x128] sm:$0xff] 0.0
        %370 = vst [vmem:[%s317 + $0x130] sm:$0xff] 0.0
        %371 = vst [vmem:[%s317 + $0x138] sm:$0xff] 0.0
        %372 = vst [vmem:[%s317 + $0x140] sm:$0xff] 0.0
        %373 = vst [vmem:[%s317 + $0x148] sm:$0xff] 0.0
        %374 = vst [vmem:[%s317 + $0x150] sm:$0xff] 0.0
        %375 = vst [vmem:[%s317 + $0x158] sm:$0xff] 0.0
        %376 = vst [vmem:[%s317 + $0x160] sm:$0xff] 0.0
        %377 = vst [vmem:[%s317 + $0x168] sm:$0xff] 0.0
        %378 = vst [vmem:[%s317 + $0x170] sm:$0xff] 0.0
        %379 = vst [vmem:[%s317 + $0x178] sm:$0xff] 0.0
        %380 = vst [vmem:[%s317 + $0x180] sm:$0xff] 0.0
        %381 = vst [vmem:[%s317 + $0x188] sm:$0xff] 0.0
        %382 = vst [vmem:[%s317 + $0x190] sm:$0xff] 0.0
        %383 = vst [vmem:[%s317 + $0x198] sm:$0xff] 0.0
        %384 = vst [vmem:[%s317 + $0x1a0] sm:$0xff] 0.0
        %385 = vst [vmem:[%s317 + $0x1a8] sm:$0xff] 0.0
        %386 = vst [vmem:[%s317 + $0x1b0] sm:$0xff] 0.0
        %387 = vst [vmem:[%s317 + $0x1b8] sm:$0xff] 0.0
        %388 = vst [vmem:[%s317 + $0x1c0] sm:$0xff] 0.0
        %389 = vst [vmem:[%s317 + $0x1c8] sm:$0xff] 0.0
        %390 = vst [vmem:[%s317 + $0x1d0] sm:$0xff] 0.0
        %391 = vst [vmem:[%s317 + $0x1d8] sm:$0xff] 0.0
        %392 = vst [vmem:[%s317 + $0x1e0] sm:$0xff] 0.0
        %393 = vst [vmem:[%s317 + $0x1e8] sm:$0xff] 0.0
        %394 = vst [vmem:[%s317 + $0x1f0] sm:$0xff] 0.0
        %395 = vst [vmem:[%s317 + $0x1f8] sm:$0xff] 0.0
      $region36: #{module_selector_forward.1} parent=31 // pred_fallthru
        _
      %p396 = scmp.gt.s32.totalorder %s324, 0
      // Predicated region
      $region37: #{module_selector_forward.1} parent=31 // pred_check
        %p397 = pneg %p396
      $region38: #{module_selector_forward.1} parent=31 // pred_check_branch
        %399 = sbr.rel (%p397) target = $region40
      $region39: #{module_selector_forward.1} parent=31 // pred_region
        %s400 = sld [smem:[#allocation4 + %s323]]
        %v401 = vld [vmem:[%s288] sm:$0xf]
        %v402 = vld [vmem:[%s288 + $0x4] sm:$0xf]
        %v403 = vld [vmem:[%s288 + $0x8] sm:$0xf]
        %v404 = vld [vmem:[%s288 + $0xc] sm:$0xf]
        %v405 = vld [vmem:[%s288 + $0x10] sm:$0xf]
        %v406 = vld [vmem:[%s288 + $0x14] sm:$0xf]
        %v407 = vld [vmem:[%s288 + $0x18] sm:$0xf]
        %v408 = vld [vmem:[%s288 + $0x1c] sm:$0xf]
        %v409 = vld [vmem:[%s288 + $0x20] sm:$0xf]
        %v410 = vld [vmem:[%s288 + $0x24] sm:$0xf]
        %v411 = vld [vmem:[%s288 + $0x28] sm:$0xf]
        %v412 = vld [vmem:[%s288 + $0x2c] sm:$0xf]
        %v413 = vld [vmem:[%s288 + $0x30] sm:$0xf]
        %v414 = vld [vmem:[%s288 + $0x34] sm:$0xf]
        %v415 = vld [vmem:[%s288 + $0x38] sm:$0xf]
        %v416 = vld [vmem:[%s288 + $0x3c] sm:$0xf]
        %v417 = vld [vmem:[%s288 + $0x40] sm:$0xf]
        %v418 = vld [vmem:[%s288 + $0x44] sm:$0xf]
        %v419 = vld [vmem:[%s288 + $0x48] sm:$0xf]
        %v420 = vld [vmem:[%s288 + $0x4c] sm:$0xf]
        %v421 = vld [vmem:[%s288 + $0x50] sm:$0xf]
        %v422 = vld [vmem:[%s288 + $0x54] sm:$0xf]
        %v423 = vld [vmem:[%s288 + $0x58] sm:$0xf]
        %v424 = vld [vmem:[%s288 + $0x5c] sm:$0xf]
        %v425 = vld [vmem:[%s288 + $0x60] sm:$0xf]
        %v426 = vld [vmem:[%s288 + $0x64] sm:$0xf]
        %v427 = vld [vmem:[%s288 + $0x68] sm:$0xf]
        %v428 = vld [vmem:[%s288 + $0x6c] sm:$0xf]
        %v429 = vld [vmem:[%s288 + $0x70] sm:$0xf]
        %v430 = vld [vmem:[%s288 + $0x74] sm:$0xf]
        %v431 = vld [vmem:[%s288 + $0x78] sm:$0xf]
        %v432 = vld [vmem:[%s288 + $0x7c] sm:$0xf]
        %v433 = vld [vmem:[%s288 + $0x80] sm:$0xf]
        %v434 = vld [vmem:[%s288 + $0x84] sm:$0xf]
        %v435 = vld [vmem:[%s288 + $0x88] sm:$0xf]
        %v436 = vld [vmem:[%s288 + $0x8c] sm:$0xf]
        %v437 = vld [vmem:[%s288 + $0x90] sm:$0xf]
        %v438 = vld [vmem:[%s288 + $0x94] sm:$0xf]
        %v439 = vld [vmem:[%s288 + $0x98] sm:$0xf]
        %v440 = vld [vmem:[%s288 + $0x9c] sm:$0xf]
        %v441 = vld [vmem:[%s288 + $0xa0] sm:$0xf]
        %v442 = vld [vmem:[%s288 + $0xa4] sm:$0xf]
        %v443 = vld [vmem:[%s288 + $0xa8] sm:$0xf]
        %v444 = vld [vmem:[%s288 + $0xac] sm:$0xf]
        %v445 = vld [vmem:[%s288 + $0xb0] sm:$0xf]
        %v446 = vld [vmem:[%s288 + $0xb4] sm:$0xf]
        %v447 = vld [vmem:[%s288 + $0xb8] sm:$0xf]
        %v448 = vld [vmem:[%s288 + $0xbc] sm:$0xf]
        %v449 = vld [vmem:[%s288 + $0xc0] sm:$0xf]
        %v450 = vld [vmem:[%s288 + $0xc4] sm:$0xf]
        %v451 = vld [vmem:[%s288 + $0xc8] sm:$0xf]
        %v452 = vld [vmem:[%s288 + $0xcc] sm:$0xf]
        %v453 = vld [vmem:[%s288 + $0xd0] sm:$0xf]
        %v454 = vld [vmem:[%s288 + $0xd4] sm:$0xf]
        %v455 = vld [vmem:[%s288 + $0xd8] sm:$0xf]
        %v456 = vld [vmem:[%s288 + $0xdc] sm:$0xf]
        %v457 = vld [vmem:[%s288 + $0xe0] sm:$0xf]
        %v458 = vld [vmem:[%s288 + $0xe4] sm:$0xf]
        %v459 = vld [vmem:[%s288 + $0xe8] sm:$0xf]
        %v460 = vld [vmem:[%s288 + $0xec] sm:$0xf]
        %v461 = vld [vmem:[%s288 + $0xf0] sm:$0xf]
        %v462 = vld [vmem:[%s288 + $0xf4] sm:$0xf]
        %v463 = vld [vmem:[%s288 + $0xf8] sm:$0xf]
        %v464 = vld [vmem:[%s288 + $0xfc] sm:$0xf]
        %v465 = vld [vmem:[%s303] sm:$0xf]
        %v466 = vld [vmem:[%s303 + $0x4] sm:$0xf]
        %v467 = vld [vmem:[%s303 + $0x8] sm:$0xf]
        %v468 = vld [vmem:[%s303 + $0xc] sm:$0xf]
        %v469 = vld [vmem:[%s303 + $0x10] sm:$0xf]
        %v470 = vld [vmem:[%s303 + $0x14] sm:$0xf]
        %v471 = vld [vmem:[%s303 + $0x18] sm:$0xf]
        %v472 = vld [vmem:[%s303 + $0x1c] sm:$0xf]
        %v473 = vld [vmem:[%s303 + $0x20] sm:$0xf]
        %v474 = vld [vmem:[%s303 + $0x24] sm:$0xf]
        %v475 = vld [vmem:[%s303 + $0x28] sm:$0xf]
        %v476 = vld [vmem:[%s303 + $0x2c] sm:$0xf]
        %v477 = vld [vmem:[%s303 + $0x30] sm:$0xf]
        %v478 = vld [vmem:[%s303 + $0x34] sm:$0xf]
        %v479 = vld [vmem:[%s303 + $0x38] sm:$0xf]
        %v480 = vld [vmem:[%s303 + $0x3c] sm:$0xf]
        %s481 = sadd.s32 %s400, %s53
        %s482 = scalar_lea.vmem %s7, %s481
        %v483 = vld [vmem:[%s482] sm:$0x1]
        %v484 = vperm.slane %v483, 0
        %v549 = vunpack.c.l.b16 %v401
        %v550 = vunpack.c.l.b16 %v402
        %v551 = vunpack.c.l.b16 %v403
        %v552 = vunpack.c.l.b16 %v404
        %v553 = vunpack.c.l.b16 %v405
        %v554 = vunpack.c.l.b16 %v406
        %v555 = vunpack.c.l.b16 %v407
        %v556 = vunpack.c.l.b16 %v408
        %v557 = vunpack.c.l.b16 %v409
        %v558 = vunpack.c.l.b16 %v410
        %v559 = vunpack.c.l.b16 %v411
        %v560 = vunpack.c.l.b16 %v412
        %v561 = vunpack.c.l.b16 %v413
        %v562 = vunpack.c.l.b16 %v414
        %v563 = vunpack.c.l.b16 %v415
        %v564 = vunpack.c.l.b16 %v416
        %v565 = vunpack.c.l.b16 %v417
        %v566 = vunpack.c.l.b16 %v418
        %v567 = vunpack.c.l.b16 %v419
        %v568 = vunpack.c.l.b16 %v420
        %v569 = vunpack.c.l.b16 %v421
        %v570 = vunpack.c.l.b16 %v422
        %v571 = vunpack.c.l.b16 %v423
        %v572 = vunpack.c.l.b16 %v424
        %v573 = vunpack.c.l.b16 %v425
        %v574 = vunpack.c.l.b16 %v426
        %v575 = vunpack.c.l.b16 %v427
        %v576 = vunpack.c.l.b16 %v428
        %v577 = vunpack.c.l.b16 %v429
        %v578 = vunpack.c.l.b16 %v430
        %v579 = vunpack.c.l.b16 %v431
        %v580 = vunpack.c.l.b16 %v432
        %v581 = vunpack.c.l.b16 %v433
        %v582 = vunpack.c.l.b16 %v434
        %v583 = vunpack.c.l.b16 %v435
        %v584 = vunpack.c.l.b16 %v436
        %v585 = vunpack.c.l.b16 %v437
        %v586 = vunpack.c.l.b16 %v438
        %v587 = vunpack.c.l.b16 %v439
        %v588 = vunpack.c.l.b16 %v440
        %v589 = vunpack.c.l.b16 %v441
        %v590 = vunpack.c.l.b16 %v442
        %v591 = vunpack.c.l.b16 %v443
        %v592 = vunpack.c.l.b16 %v444
        %v593 = vunpack.c.l.b16 %v445
        %v594 = vunpack.c.l.b16 %v446
        %v595 = vunpack.c.l.b16 %v447
        %v596 = vunpack.c.l.b16 %v448
        %v597 = vunpack.c.l.b16 %v449
        %v598 = vunpack.c.l.b16 %v450
        %v599 = vunpack.c.l.b16 %v451
        %v600 = vunpack.c.l.b16 %v452
        %v601 = vunpack.c.l.b16 %v453
        %v602 = vunpack.c.l.b16 %v454
        %v603 = vunpack.c.l.b16 %v455
        %v604 = vunpack.c.l.b16 %v456
        %v605 = vunpack.c.l.b16 %v457
        %v606 = vunpack.c.l.b16 %v458
        %v607 = vunpack.c.l.b16 %v459
        %v608 = vunpack.c.l.b16 %v460
        %v609 = vunpack.c.l.b16 %v461
        %v610 = vunpack.c.l.b16 %v462
        %v611 = vunpack.c.l.b16 %v463
        %v612 = vunpack.c.l.b16 %v464
        %v613 = vpack.c.b16 %v550, %v549
        %v614 = vpack.c.b16 %v552, %v551
        %v615 = vpack.c.b16 %v554, %v553
        %v616 = vpack.c.b16 %v556, %v555
        %v617 = vpack.c.b16 %v558, %v557
        %v618 = vpack.c.b16 %v560, %v559
        %v619 = vpack.c.b16 %v562, %v561
        %v620 = vpack.c.b16 %v564, %v563
        %v621 = vpack.c.b16 %v566, %v565
        %v622 = vpack.c.b16 %v568, %v567
        %v623 = vpack.c.b16 %v570, %v569
        %v624 = vpack.c.b16 %v572, %v571
        %v625 = vpack.c.b16 %v574, %v573
        %v626 = vpack.c.b16 %v576, %v575
        %v627 = vpack.c.b16 %v578, %v577
        %v628 = vpack.c.b16 %v580, %v579
        %v629 = vpack.c.b16 %v582, %v581
        %v630 = vpack.c.b16 %v584, %v583
        %v631 = vpack.c.b16 %v586, %v585
        %v632 = vpack.c.b16 %v588, %v587
        %v633 = vpack.c.b16 %v590, %v589
        %v634 = vpack.c.b16 %v592, %v591
        %v635 = vpack.c.b16 %v594, %v593
        %v636 = vpack.c.b16 %v596, %v595
        %v637 = vpack.c.b16 %v598, %v597
        %v638 = vpack.c.b16 %v600, %v599
        %v639 = vpack.c.b16 %v602, %v601
        %v640 = vpack.c.b16 %v604, %v603
        %v641 = vpack.c.b16 %v606, %v605
        %v642 = vpack.c.b16 %v608, %v607
        %v643 = vpack.c.b16 %v610, %v609
        %v644 = vpack.c.b16 %v612, %v611
        %v693 = vunpack.c.l.b16 %v465
        %v694 = vunpack.c.l.b16 %v466
        %v695 = vunpack.c.l.b16 %v467
        %v696 = vunpack.c.l.b16 %v468
        %v697 = vunpack.c.l.b16 %v469
        %v698 = vunpack.c.l.b16 %v470
        %v699 = vunpack.c.l.b16 %v471
        %v700 = vunpack.c.l.b16 %v472
        %v701 = vunpack.c.l.b16 %v473
        %v702 = vunpack.c.l.b16 %v474
        %v703 = vunpack.c.l.b16 %v475
        %v704 = vunpack.c.l.b16 %v476
        %v705 = vunpack.c.l.b16 %v477
        %v706 = vunpack.c.l.b16 %v478
        %v707 = vunpack.c.l.b16 %v479
        %v708 = vunpack.c.l.b16 %v480
        %v709 = vpack.c.b16 %v694, %v693
        %v710 = vpack.c.b16 %v696, %v695
        %v711 = vpack.c.b16 %v698, %v697
        %v712 = vpack.c.b16 %v700, %v699
        %v713 = vpack.c.b16 %v702, %v701
        %v714 = vpack.c.b16 %v704, %v703
        %v715 = vpack.c.b16 %v706, %v705
        %v716 = vpack.c.b16 %v708, %v707
        %725 = vmatpush.bf16.msra.mxu0 %v716
        %726 = vmatpush.bf16.msra.mxu0 %v715
        %727 = vmatpush.bf16.msra.mxu0 %v714
        %728 = vmatpush.bf16.msra.mxu0 %v713
        %729 = vmatpush.bf16.msra.mxu0 %v712
        %730 = vmatpush.bf16.msra.mxu0 %v711
        %731 = vmatpush.bf16.msra.mxu0 %v710
        %732 = vmatpush.bf16.msra.mxu0 %v709
        %733 = vmatmul.bf16.gmra.mxu0 %v613
        %v734 = vpop.f32.mrf.mxu0
        %v735 = vadd.f32 %v484, %v734
        %v736 = vpop.f32.mrf.mxu0
        %v737 = vadd.f32 %v484, %v736
        %738 = vmatmul.bf16.gmra.mxu0 %v614
        %v739 = vpop.f32.mrf.mxu0
        %v740 = vadd.f32 %v484, %v739
        %v741 = vpop.f32.mrf.mxu0
        %v742 = vadd.f32 %v484, %v741
        %743 = vmatmul.bf16.gmra.mxu0 %v615
        %v744 = vpop.f32.mrf.mxu0
        %v745 = vadd.f32 %v484, %v744
        %v746 = vpop.f32.mrf.mxu0
        %v747 = vadd.f32 %v484, %v746
        %748 = vmatmul.bf16.gmra.mxu0 %v616
        %v749 = vpop.f32.mrf.mxu0
        %v750 = vadd.f32 %v484, %v749
        %v751 = vpop.f32.mrf.mxu0
        %v752 = vadd.f32 %v484, %v751
        %753 = vmatmul.bf16.gmra.mxu0 %v617
        %v754 = vpop.f32.mrf.mxu0
        %v755 = vadd.f32 %v484, %v754
        %v756 = vpop.f32.mrf.mxu0
        %v757 = vadd.f32 %v484, %v756
        %758 = vmatmul.bf16.gmra.mxu0 %v618
        %v759 = vpop.f32.mrf.mxu0
        %v760 = vadd.f32 %v484, %v759
        %v761 = vpop.f32.mrf.mxu0
        %v762 = vadd.f32 %v484, %v761
        %763 = vmatmul.bf16.gmra.mxu0 %v619
        %v764 = vpop.f32.mrf.mxu0
        %v765 = vadd.f32 %v484, %v764
        %v766 = vpop.f32.mrf.mxu0
        %v767 = vadd.f32 %v484, %v766
        %768 = vmatmul.bf16.gmra.mxu0 %v620
        %v769 = vpop.f32.mrf.mxu0
        %v770 = vadd.f32 %v484, %v769
        %v771 = vpop.f32.mrf.mxu0
        %v772 = vadd.f32 %v484, %v771
        %773 = vmatmul.bf16.gmra.mxu0 %v621
        %v774 = vpop.f32.mrf.mxu0
        %v775 = vadd.f32 %v484, %v774
        %v776 = vpop.f32.mrf.mxu0
        %v777 = vadd.f32 %v484, %v776
        %778 = vmatmul.bf16.gmra.mxu0 %v622
        %v779 = vpop.f32.mrf.mxu0
        %v780 = vadd.f32 %v484, %v779
        %v781 = vpop.f32.mrf.mxu0
        %v782 = vadd.f32 %v484, %v781
        %783 = vmatmul.bf16.gmra.mxu0 %v623
        %v784 = vpop.f32.mrf.mxu0
        %v785 = vadd.f32 %v484, %v784
        %v786 = vpop.f32.mrf.mxu0
        %v787 = vadd.f32 %v484, %v786
        %788 = vmatmul.bf16.gmra.mxu0 %v624
        %v789 = vpop.f32.mrf.mxu0
        %v790 = vadd.f32 %v484, %v789
        %v791 = vpop.f32.mrf.mxu0
        %v792 = vadd.f32 %v484, %v791
        %793 = vmatmul.bf16.gmra.mxu0 %v625
        %v794 = vpop.f32.mrf.mxu0
        %v795 = vadd.f32 %v484, %v794
        %v796 = vpop.f32.mrf.mxu0
        %v797 = vadd.f32 %v484, %v796
        %798 = vmatmul.bf16.gmra.mxu0 %v626
        %v799 = vpop.f32.mrf.mxu0
        %v800 = vadd.f32 %v484, %v799
        %v801 = vpop.f32.mrf.mxu0
        %v802 = vadd.f32 %v484, %v801
        %803 = vmatmul.bf16.gmra.mxu0 %v627
        %v804 = vpop.f32.mrf.mxu0
        %v805 = vadd.f32 %v484, %v804
        %v806 = vpop.f32.mrf.mxu0
        %v807 = vadd.f32 %v484, %v806
        %808 = vmatmul.bf16.gmra.mxu0 %v628
        %v809 = vpop.f32.mrf.mxu0
        %v810 = vadd.f32 %v484, %v809
        %v811 = vpop.f32.mrf.mxu0
        %v812 = vadd.f32 %v484, %v811
        %813 = vmatmul.bf16.gmra.mxu0 %v629
        %v814 = vpop.f32.mrf.mxu0
        %v815 = vadd.f32 %v484, %v814
        %v816 = vpop.f32.mrf.mxu0
        %v817 = vadd.f32 %v484, %v816
        %818 = vmatmul.bf16.gmra.mxu0 %v630
        %v819 = vpop.f32.mrf.mxu0
        %v820 = vadd.f32 %v484, %v819
        %v821 = vpop.f32.mrf.mxu0
        %v822 = vadd.f32 %v484, %v821
        %823 = vmatmul.bf16.gmra.mxu0 %v631
        %v824 = vpop.f32.mrf.mxu0
        %v825 = vadd.f32 %v484, %v824
        %v826 = vpop.f32.mrf.mxu0
        %v827 = vadd.f32 %v484, %v826
        %828 = vmatmul.bf16.gmra.mxu0 %v632
        %v829 = vpop.f32.mrf.mxu0
        %v830 = vadd.f32 %v484, %v829
        %v831 = vpop.f32.mrf.mxu0
        %v832 = vadd.f32 %v484, %v831
        %833 = vmatmul.bf16.gmra.mxu0 %v633
        %v834 = vpop.f32.mrf.mxu0
        %v835 = vadd.f32 %v484, %v834
        %v836 = vpop.f32.mrf.mxu0
        %v837 = vadd.f32 %v484, %v836
        %838 = vmatmul.bf16.gmra.mxu0 %v634
        %v839 = vpop.f32.mrf.mxu0
        %v840 = vadd.f32 %v484, %v839
        %v841 = vpop.f32.mrf.mxu0
        %v842 = vadd.f32 %v484, %v841
        %843 = vmatmul.bf16.gmra.mxu0 %v635
        %v844 = vpop.f32.mrf.mxu0
        %v845 = vadd.f32 %v484, %v844
        %v846 = vpop.f32.mrf.mxu0
        %v847 = vadd.f32 %v484, %v846
        %848 = vmatmul.bf16.gmra.mxu0 %v636
        %v849 = vpop.f32.mrf.mxu0
        %v850 = vadd.f32 %v484, %v849
        %v851 = vpop.f32.mrf.mxu0
        %v852 = vadd.f32 %v484, %v851
        %853 = vmatmul.bf16.gmra.mxu0 %v637
        %v854 = vpop.f32.mrf.mxu0
        %v855 = vadd.f32 %v484, %v854
        %v856 = vpop.f32.mrf.mxu0
        %v857 = vadd.f32 %v484, %v856
        %858 = vmatmul.bf16.gmra.mxu0 %v638
        %v859 = vpop.f32.mrf.mxu0
        %v860 = vadd.f32 %v484, %v859
        %v861 = vpop.f32.mrf.mxu0
        %v862 = vadd.f32 %v484, %v861
        %863 = vmatmul.bf16.gmra.mxu0 %v639
        %v864 = vpop.f32.mrf.mxu0
        %v865 = vadd.f32 %v484, %v864
        %v866 = vpop.f32.mrf.mxu0
        %v867 = vadd.f32 %v484, %v866
        %868 = vmatmul.bf16.gmra.mxu0 %v640
        %v869 = vpop.f32.mrf.mxu0
        %v870 = vadd.f32 %v484, %v869
        %v871 = vpop.f32.mrf.mxu0
        %v872 = vadd.f32 %v484, %v871
        %873 = vmatmul.bf16.gmra.mxu0 %v641
        %v874 = vpop.f32.mrf.mxu0
        %v875 = vadd.f32 %v484, %v874
        %v876 = vpop.f32.mrf.mxu0
        %v877 = vadd.f32 %v484, %v876
        %878 = vmatmul.bf16.gmra.mxu0 %v642
        %v879 = vpop.f32.mrf.mxu0
        %v880 = vadd.f32 %v484, %v879
        %v881 = vpop.f32.mrf.mxu0
        %v882 = vadd.f32 %v484, %v881
        %883 = vmatmul.bf16.gmra.mxu0 %v643
        %v884 = vpop.f32.mrf.mxu0
        %v885 = vadd.f32 %v484, %v884
        %v886 = vpop.f32.mrf.mxu0
        %v887 = vadd.f32 %v484, %v886
        %888 = vmatmul.bf16.gmra.mxu0 %v644
        %v889 = vpop.f32.mrf.mxu0
        %v890 = vadd.f32 %v484, %v889
        %v891 = vpop.f32.mrf.mxu0
        %v892 = vadd.f32 %v484, %v891
        %893 = vdwg.mxu0
        %p894 = scmp.eq.s32.totalorder %s324, 512
        // Predicated region
        $region41: #{module_selector_forward.1} parent=39 // pred_check
          %p895 = pneg %p894
        $region42: #{module_selector_forward.1} parent=39 // pred_check_branch
          %897 = sbr.rel (%p895) target = $region44
        $region43: #{module_selector_forward.1} parent=39 // pred_region
          %898 = vst [vmem:[%s317] sm:$0xff] %v735
          %899 = vst [vmem:[%s317 + $0x8] sm:$0xff] %v737
          %900 = vst [vmem:[%s317 + $0x10] sm:$0xff] %v740
          %901 = vst [vmem:[%s317 + $0x18] sm:$0xff] %v742
          %902 = vst [vmem:[%s317 + $0x20] sm:$0xff] %v745
          %903 = vst [vmem:[%s317 + $0x28] sm:$0xff] %v747
          %904 = vst [vmem:[%s317 + $0x30] sm:$0xff] %v750
          %905 = vst [vmem:[%s317 + $0x38] sm:$0xff] %v752
          %906 = vst [vmem:[%s317 + $0x40] sm:$0xff] %v755
          %907 = vst [vmem:[%s317 + $0x48] sm:$0xff] %v757
          %908 = vst [vmem:[%s317 + $0x50] sm:$0xff] %v760
          %909 = vst [vmem:[%s317 + $0x58] sm:$0xff] %v762
          %910 = vst [vmem:[%s317 + $0x60] sm:$0xff] %v765
          %911 = vst [vmem:[%s317 + $0x68] sm:$0xff] %v767
          %912 = vst [vmem:[%s317 + $0x70] sm:$0xff] %v770
          %913 = vst [vmem:[%s317 + $0x78] sm:$0xff] %v772
          %914 = vst [vmem:[%s317 + $0x80] sm:$0xff] %v775
          %915 = vst [vmem:[%s317 + $0x88] sm:$0xff] %v777
          %916 = vst [vmem:[%s317 + $0x90] sm:$0xff] %v780
          %917 = vst [vmem:[%s317 + $0x98] sm:$0xff] %v782
          %918 = vst [vmem:[%s317 + $0xa0] sm:$0xff] %v785
          %919 = vst [vmem:[%s317 + $0xa8] sm:$0xff] %v787
          %920 = vst [vmem:[%s317 + $0xb0] sm:$0xff] %v790
          %921 = vst [vmem:[%s317 + $0xb8] sm:$0xff] %v792
          %922 = vst [vmem:[%s317 + $0xc0] sm:$0xff] %v795
          %923 = vst [vmem:[%s317 + $0xc8] sm:$0xff] %v797
          %924 = vst [vmem:[%s317 + $0xd0] sm:$0xff] %v800
          %925 = vst [vmem:[%s317 + $0xd8] sm:$0xff] %v802
          %926 = vst [vmem:[%s317 + $0xe0] sm:$0xff] %v805
          %927 = vst [vmem:[%s317 + $0xe8] sm:$0xff] %v807
          %928 = vst [vmem:[%s317 + $0xf0] sm:$0xff] %v810
          %929 = vst [vmem:[%s317 + $0xf8] sm:$0xff] %v812
          %930 = vst [vmem:[%s317 + $0x100] sm:$0xff] %v815
          %931 = vst [vmem:[%s317 + $0x108] sm:$0xff] %v817
          %932 = vst [vmem:[%s317 + $0x110] sm:$0xff] %v820
          %933 = vst [vmem:[%s317 + $0x118] sm:$0xff] %v822
          %934 = vst [vmem:[%s317 + $0x120] sm:$0xff] %v825
          %935 = vst [vmem:[%s317 + $0x128] sm:$0xff] %v827
          %936 = vst [vmem:[%s317 + $0x130] sm:$0xff] %v830
          %937 = vst [vmem:[%s317 + $0x138] sm:$0xff] %v832
          %938 = vst [vmem:[%s317 + $0x140] sm:$0xff] %v835
          %939 = vst [vmem:[%s317 + $0x148] sm:$0xff] %v837
          %940 = vst [vmem:[%s317 + $0x150] sm:$0xff] %v840
          %941 = vst [vmem:[%s317 + $0x158] sm:$0xff] %v842
          %942 = vst [vmem:[%s317 + $0x160] sm:$0xff] %v845
          %943 = vst [vmem:[%s317 + $0x168] sm:$0xff] %v847
          %944 = vst [vmem:[%s317 + $0x170] sm:$0xff] %v850
          %945 = vst [vmem:[%s317 + $0x178] sm:$0xff] %v852
          %946 = vst [vmem:[%s317 + $0x180] sm:$0xff] %v855
          %947 = vst [vmem:[%s317 + $0x188] sm:$0xff] %v857
          %948 = vst [vmem:[%s317 + $0x190] sm:$0xff] %v860
          %949 = vst [vmem:[%s317 + $0x198] sm:$0xff] %v862
          %950 = vst [vmem:[%s317 + $0x1a0] sm:$0xff] %v865
          %951 = vst [vmem:[%s317 + $0x1a8] sm:$0xff] %v867
          %952 = vst [vmem:[%s317 + $0x1b0] sm:$0xff] %v870
          %953 = vst [vmem:[%s317 + $0x1b8] sm:$0xff] %v872
          %954 = vst [vmem:[%s317 + $0x1c0] sm:$0xff] %v875
          %955 = vst [vmem:[%s317 + $0x1c8] sm:$0xff] %v877
          %956 = vst [vmem:[%s317 + $0x1d0] sm:$0xff] %v880
          %957 = vst [vmem:[%s317 + $0x1d8] sm:$0xff] %v882
          %958 = vst [vmem:[%s317 + $0x1e0] sm:$0xff] %v885
          %959 = vst [vmem:[%s317 + $0x1e8] sm:$0xff] %v887
          %960 = vst [vmem:[%s317 + $0x1f0] sm:$0xff] %v890
          %961 = vst [vmem:[%s317 + $0x1f8] sm:$0xff] %v892
        $region44: #{module_selector_forward.1} parent=39 // pred_fallthru
          _
        // Predicated region
        $region45: #{module_selector_forward.1} parent=39 // pred_check
          %p962 = pneg %p327
        $region46: #{module_selector_forward.1} parent=39 // pred_check_branch
          %964 = sbr.rel (%p962) target = $region48
        $region47: #{module_selector_forward.1} parent=39 // pred_region
          %s965 = sld [smem:[#allocation6 + %s323]]
          %v966 = vlaneseq
          %v967 = vshrl.u32 %v966, 7
          %v968 = vadd.s32 %v967, 8
          %v969 = vadd.s32 %v967, 16
          %v970 = vadd.s32 %v967, 24
          %v971 = vadd.s32 %v967, 32
          %v972 = vadd.s32 %v967, 40
          %v973 = vadd.s32 %v967, 48
          %v974 = vadd.s32 %v967, 56
          %v975 = vadd.s32 %v967, 64
          %v976 = vadd.s32 %v967, 72
          %v977 = vadd.s32 %v967, 80
          %v978 = vadd.s32 %v967, 88
          %v979 = vadd.s32 %v967, 96
          %v980 = vadd.s32 %v967, 104
          %v981 = vadd.s32 %v967, 112
          %v982 = vadd.s32 %v967, 120
          %v983 = vadd.s32 %v967, 128
          %v984 = vadd.s32 %v967, 136
          %v985 = vadd.s32 %v967, 144
          %v986 = vadd.s32 %v967, 152
          %v987 = vadd.s32 %v967, 160
          %v988 = vadd.s32 %v967, 168
          %v989 = vadd.s32 %v967, 176
          %v990 = vadd.s32 %v967, 184
          %v991 = vadd.s32 %v967, 192
          %v992 = vadd.s32 %v967, 200
          %v993 = vadd.s32 %v967, 208
          %v994 = vadd.s32 %v967, 216
          %v995 = vadd.s32 %v967, 224
          %v996 = vadd.s32 %v967, 232
          %v997 = vadd.s32 %v967, 240
          %v998 = vadd.s32 %v967, 248
          %v999 = vadd.s32 %v967, 256
          %v1000 = vadd.s32 %v967, 264
          %v1001 = vadd.s32 %v967, 272
          %v1002 = vadd.s32 %v967, 280
          %v1003 = vadd.s32 %v967, 288
          %v1004 = vadd.s32 %v967, 296
          %v1005 = vadd.s32 %v967, 304
          %v1006 = vadd.s32 %v967, 312
          %v1007 = vadd.s32 %v967, 320
          %v1008 = vadd.s32 %v967, 328
          %v1009 = vadd.s32 %v967, 336
          %v1010 = vadd.s32 %v967, 344
          %v1011 = vadd.s32 %v967, 352
          %v1012 = vadd.s32 %v967, 360
          %v1013 = vadd.s32 %v967, 368
          %v1014 = vadd.s32 %v967, 376
          %v1015 = vadd.s32 %v967, 384
          %v1016 = vadd.s32 %v967, 392
          %v1017 = vadd.s32 %v967, 400
          %v1018 = vadd.s32 %v967, 408
          %v1019 = vadd.s32 %v967, 416
          %v1020 = vadd.s32 %v967, 424
          %v1021 = vadd.s32 %v967, 432
          %v1022 = vadd.s32 %v967, 440
          %v1023 = vadd.s32 %v967, 448
          %v1024 = vadd.s32 %v967, 456
          %v1025 = vadd.s32 %v967, 464
          %v1026 = vadd.s32 %v967, 472
          %v1027 = vadd.s32 %v967, 480
          %v1028 = vadd.s32 %v967, 488
          %v1029 = vadd.s32 %v967, 496
          %v1030 = vadd.s32 %v967, 504
          %v1031 = vstv %s965
          %vm1032 = vcmp.ge.s32.totalorder %v967, %v1031
          %vm1033 = vcmp.ge.s32.totalorder %v968, %v1031
          %vm1034 = vcmp.ge.s32.totalorder %v969, %v1031
          %vm1035 = vcmp.ge.s32.totalorder %v970, %v1031
          %vm1036 = vcmp.ge.s32.totalorder %v971, %v1031
          %vm1037 = vcmp.ge.s32.totalorder %v972, %v1031
          %vm1038 = vcmp.ge.s32.totalorder %v973, %v1031
          %vm1039 = vcmp.ge.s32.totalorder %v974, %v1031
          %vm1040 = vcmp.ge.s32.totalorder %v975, %v1031
          %vm1041 = vcmp.ge.s32.totalorder %v976, %v1031
          %vm1042 = vcmp.ge.s32.totalorder %v977, %v1031
          %vm1043 = vcmp.ge.s32.totalorder %v978, %v1031
          %vm1044 = vcmp.ge.s32.totalorder %v979, %v1031
          %vm1045 = vcmp.ge.s32.totalorder %v980, %v1031
          %vm1046 = vcmp.ge.s32.totalorder %v981, %v1031
          %vm1047 = vcmp.ge.s32.totalorder %v982, %v1031
          %vm1048 = vcmp.ge.s32.totalorder %v983, %v1031
          %vm1049 = vcmp.ge.s32.totalorder %v984, %v1031
          %vm1050 = vcmp.ge.s32.totalorder %v985, %v1031
          %vm1051 = vcmp.ge.s32.totalorder %v986, %v1031
          %vm1052 = vcmp.ge.s32.totalorder %v987, %v1031
          %vm1053 = vcmp.ge.s32.totalorder %v988, %v1031
          %vm1054 = vcmp.ge.s32.totalorder %v989, %v1031
          %vm1055 = vcmp.ge.s32.totalorder %v990, %v1031
          %vm1056 = vcmp.ge.s32.totalorder %v991, %v1031
          %vm1057 = vcmp.ge.s32.totalorder %v992, %v1031
          %vm1058 = vcmp.ge.s32.totalorder %v993, %v1031
          %vm1059 = vcmp.ge.s32.totalorder %v994, %v1031
          %vm1060 = vcmp.ge.s32.totalorder %v995, %v1031
          %vm1061 = vcmp.ge.s32.totalorder %v996, %v1031
          %vm1062 = vcmp.ge.s32.totalorder %v997, %v1031
          %vm1063 = vcmp.ge.s32.totalorder %v998, %v1031
          %vm1064 = vcmp.ge.s32.totalorder %v999, %v1031
          %vm1065 = vcmp.ge.s32.totalorder %v1000, %v1031
          %vm1066 = vcmp.ge.s32.totalorder %v1001, %v1031
          %vm1067 = vcmp.ge.s32.totalorder %v1002, %v1031
          %vm1068 = vcmp.ge.s32.totalorder %v1003, %v1031
          %vm1069 = vcmp.ge.s32.totalorder %v1004, %v1031
          %vm1070 = vcmp.ge.s32.totalorder %v1005, %v1031
          %vm1071 = vcmp.ge.s32.totalorder %v1006, %v1031
          %vm1072 = vcmp.ge.s32.totalorder %v1007, %v1031
          %vm1073 = vcmp.ge.s32.totalorder %v1008, %v1031
          %vm1074 = vcmp.ge.s32.totalorder %v1009, %v1031
          %vm1075 = vcmp.ge.s32.totalorder %v1010, %v1031
          %vm1076 = vcmp.ge.s32.totalorder %v1011, %v1031
          %vm1077 = vcmp.ge.s32.totalorder %v1012, %v1031
          %vm1078 = vcmp.ge.s32.totalorder %v1013, %v1031
          %vm1079 = vcmp.ge.s32.totalorder %v1014, %v1031
          %vm1080 = vcmp.ge.s32.totalorder %v1015, %v1031
          %vm1081 = vcmp.ge.s32.totalorder %v1016, %v1031
          %vm1082 = vcmp.ge.s32.totalorder %v1017, %v1031
          %vm1083 = vcmp.ge.s32.totalorder %v1018, %v1031
          %vm1084 = vcmp.ge.s32.totalorder %v1019, %v1031
          %vm1085 = vcmp.ge.s32.totalorder %v1020, %v1031
          %vm1086 = vcmp.ge.s32.totalorder %v1021, %v1031
          %vm1087 = vcmp.ge.s32.totalorder %v1022, %v1031
          %vm1088 = vcmp.ge.s32.totalorder %v1023, %v1031
          %vm1089 = vcmp.ge.s32.totalorder %v1024, %v1031
          %vm1090 = vcmp.ge.s32.totalorder %v1025, %v1031
          %vm1091 = vcmp.ge.s32.totalorder %v1026, %v1031
          %vm1092 = vcmp.ge.s32.totalorder %v1027, %v1031
          %vm1093 = vcmp.ge.s32.totalorder %v1028, %v1031
          %vm1094 = vcmp.ge.s32.totalorder %v1029, %v1031
          %vm1095 = vcmp.ge.s32.totalorder %v1030, %v1031
          %s1096 = sadd.s32 %s965, %s324
          %v1097 = vstv %s1096
          %vm1098 = vcmp.lt.s32.totalorder %v967, %v1097
          %vm1099 = vcmp.lt.s32.totalorder %v968, %v1097
          %vm1100 = vcmp.lt.s32.totalorder %v969, %v1097
          %vm1101 = vcmp.lt.s32.totalorder %v970, %v1097
          %vm1102 = vcmp.lt.s32.totalorder %v971, %v1097
          %vm1103 = vcmp.lt.s32.totalorder %v972, %v1097
          %vm1104 = vcmp.lt.s32.totalorder %v973, %v1097
          %vm1105 = vcmp.lt.s32.totalorder %v974, %v1097
          %vm1106 = vcmp.lt.s32.totalorder %v975, %v1097
          %vm1107 = vcmp.lt.s32.totalorder %v976, %v1097
          %vm1108 = vcmp.lt.s32.totalorder %v977, %v1097
          %vm1109 = vcmp.lt.s32.totalorder %v978, %v1097
          %vm1110 = vcmp.lt.s32.totalorder %v979, %v1097
          %vm1111 = vcmp.lt.s32.totalorder %v980, %v1097
          %vm1112 = vcmp.lt.s32.totalorder %v981, %v1097
          %vm1113 = vcmp.lt.s32.totalorder %v982, %v1097
          %vm1114 = vcmp.lt.s32.totalorder %v983, %v1097
          %vm1115 = vcmp.lt.s32.totalorder %v984, %v1097
          %vm1116 = vcmp.lt.s32.totalorder %v985, %v1097
          %vm1117 = vcmp.lt.s32.totalorder %v986, %v1097
          %vm1118 = vcmp.lt.s32.totalorder %v987, %v1097
          %vm1119 = vcmp.lt.s32.totalorder %v988, %v1097
          %vm1120 = vcmp.lt.s32.totalorder %v989, %v1097
          %vm1121 = vcmp.lt.s32.totalorder %v990, %v1097
          %vm1122 = vcmp.lt.s32.totalorder %v991, %v1097
          %vm1123 = vcmp.lt.s32.totalorder %v992, %v1097
          %vm1124 = vcmp.lt.s32.totalorder %v993, %v1097
          %vm1125 = vcmp.lt.s32.totalorder %v994, %v1097
          %vm1126 = vcmp.lt.s32.totalorder %v995, %v1097
          %vm1127 = vcmp.lt.s32.totalorder %v996, %v1097
          %vm1128 = vcmp.lt.s32.totalorder %v997, %v1097
          %vm1129 = vcmp.lt.s32.totalorder %v998, %v1097
          %vm1130 = vcmp.lt.s32.totalorder %v999, %v1097
          %vm1131 = vcmp.lt.s32.totalorder %v1000, %v1097
          %vm1132 = vcmp.lt.s32.totalorder %v1001, %v1097
          %vm1133 = vcmp.lt.s32.totalorder %v1002, %v1097
          %vm1134 = vcmp.lt.s32.totalorder %v1003, %v1097
          %vm1135 = vcmp.lt.s32.totalorder %v1004, %v1097
          %vm1136 = vcmp.lt.s32.totalorder %v1005, %v1097
          %vm1137 = vcmp.lt.s32.totalorder %v1006, %v1097
          %vm1138 = vcmp.lt.s32.totalorder %v1007, %v1097
          %vm1139 = vcmp.lt.s32.totalorder %v1008, %v1097
          %vm1140 = vcmp.lt.s32.totalorder %v1009, %v1097
          %vm1141 = vcmp.lt.s32.totalorder %v1010, %v1097
          %vm1142 = vcmp.lt.s32.totalorder %v1011, %v1097
          %vm1143 = vcmp.lt.s32.totalorder %v1012, %v1097
          %vm1144 = vcmp.lt.s32.totalorder %v1013, %v1097
          %vm1145 = vcmp.lt.s32.totalorder %v1014, %v1097
          %vm1146 = vcmp.lt.s32.totalorder %v1015, %v1097
          %vm1147 = vcmp.lt.s32.totalorder %v1016, %v1097
          %vm1148 = vcmp.lt.s32.totalorder %v1017, %v1097
          %vm1149 = vcmp.lt.s32.totalorder %v1018, %v1097
          %vm1150 = vcmp.lt.s32.totalorder %v1019, %v1097
          %vm1151 = vcmp.lt.s32.totalorder %v1020, %v1097
          %vm1152 = vcmp.lt.s32.totalorder %v1021, %v1097
          %vm1153 = vcmp.lt.s32.totalorder %v1022, %v1097
          %vm1154 = vcmp.lt.s32.totalorder %v1023, %v1097
          %vm1155 = vcmp.lt.s32.totalorder %v1024, %v1097
          %vm1156 = vcmp.lt.s32.totalorder %v1025, %v1097
          %vm1157 = vcmp.lt.s32.totalorder %v1026, %v1097
          %vm1158 = vcmp.lt.s32.totalorder %v1027, %v1097
          %vm1159 = vcmp.lt.s32.totalorder %v1028, %v1097
          %vm1160 = vcmp.lt.s32.totalorder %v1029, %v1097
          %vm1161 = vcmp.lt.s32.totalorder %v1030, %v1097
          %vm1162 = vmand %vm1032, %vm1098
          %vm1163 = vmand %vm1033, %vm1099
          %vm1164 = vmand %vm1034, %vm1100
          %vm1165 = vmand %vm1035, %vm1101
          %vm1166 = vmand %vm1036, %vm1102
          %vm1167 = vmand %vm1037, %vm1103
          %vm1168 = vmand %vm1038, %vm1104
          %vm1169 = vmand %vm1039, %vm1105
          %vm1170 = vmand %vm1040, %vm1106
          %vm1171 = vmand %vm1041, %vm1107
          %vm1172 = vmand %vm1042, %vm1108
          %vm1173 = vmand %vm1043, %vm1109
          %vm1174 = vmand %vm1044, %vm1110
          %vm1175 = vmand %vm1045, %vm1111
          %vm1176 = vmand %vm1046, %vm1112
          %vm1177 = vmand %vm1047, %vm1113
          %vm1178 = vmand %vm1048, %vm1114
          %vm1179 = vmand %vm1049, %vm1115
          %vm1180 = vmand %vm1050, %vm1116
          %vm1181 = vmand %vm1051, %vm1117
          %vm1182 = vmand %vm1052, %vm1118
          %vm1183 = vmand %vm1053, %vm1119
          %vm1184 = vmand %vm1054, %vm1120
          %vm1185 = vmand %vm1055, %vm1121
          %vm1186 = vmand %vm1056, %vm1122
          %vm1187 = vmand %vm1057, %vm1123
          %vm1188 = vmand %vm1058, %vm1124
          %vm1189 = vmand %vm1059, %vm1125
          %vm1190 = vmand %vm1060, %vm1126
          %vm1191 = vmand %vm1061, %vm1127
          %vm1192 = vmand %vm1062, %vm1128
          %vm1193 = vmand %vm1063, %vm1129
          %vm1194 = vmand %vm1064, %vm1130
          %vm1195 = vmand %vm1065, %vm1131
          %vm1196 = vmand %vm1066, %vm1132
          %vm1197 = vmand %vm1067, %vm1133
          %vm1198 = vmand %vm1068, %vm1134
          %vm1199 = vmand %vm1069, %vm1135
          %vm1200 = vmand %vm1070, %vm1136
          %vm1201 = vmand %vm1071, %vm1137
          %vm1202 = vmand %vm1072, %vm1138
          %vm1203 = vmand %vm1073, %vm1139
          %vm1204 = vmand %vm1074, %vm1140
          %vm1205 = vmand %vm1075, %vm1141
          %vm1206 = vmand %vm1076, %vm1142
          %vm1207 = vmand %vm1077, %vm1143
          %vm1208 = vmand %vm1078, %vm1144
          %vm1209 = vmand %vm1079, %vm1145
          %vm1210 = vmand %vm1080, %vm1146
          %vm1211 = vmand %vm1081, %vm1147
          %vm1212 = vmand %vm1082, %vm1148
          %vm1213 = vmand %vm1083, %vm1149
          %vm1214 = vmand %vm1084, %vm1150
          %vm1215 = vmand %vm1085, %vm1151
          %vm1216 = vmand %vm1086, %vm1152
          %vm1217 = vmand %vm1087, %vm1153
          %vm1218 = vmand %vm1088, %vm1154
          %vm1219 = vmand %vm1089, %vm1155
          %vm1220 = vmand %vm1090, %vm1156
          %vm1221 = vmand %vm1091, %vm1157
          %vm1222 = vmand %vm1092, %vm1158
          %vm1223 = vmand %vm1093, %vm1159
          %vm1224 = vmand %vm1094, %vm1160
          %vm1225 = vmand %vm1095, %vm1161
          %v1226 = vld [vmem:[%s317] sm:$0xff]
          %v1227 = vld [vmem:[%s317 + $0x8] sm:$0xff]
          %v1228 = vld [vmem:[%s317 + $0x10] sm:$0xff]
          %v1229 = vld [vmem:[%s317 + $0x18] sm:$0xff]
          %v1230 = vld [vmem:[%s317 + $0x20] sm:$0xff]
          %v1231 = vld [vmem:[%s317 + $0x28] sm:$0xff]
          %v1232 = vld [vmem:[%s317 + $0x30] sm:$0xff]
          %v1233 = vld [vmem:[%s317 + $0x38] sm:$0xff]
          %v1234 = vld [vmem:[%s317 + $0x40] sm:$0xff]
          %v1235 = vld [vmem:[%s317 + $0x48] sm:$0xff]
          %v1236 = vld [vmem:[%s317 + $0x50] sm:$0xff]
          %v1237 = vld [vmem:[%s317 + $0x58] sm:$0xff]
          %v1238 = vld [vmem:[%s317 + $0x60] sm:$0xff]
          %v1239 = vld [vmem:[%s317 + $0x68] sm:$0xff]
          %v1240 = vld [vmem:[%s317 + $0x70] sm:$0xff]
          %v1241 = vld [vmem:[%s317 + $0x78] sm:$0xff]
          %v1242 = vld [vmem:[%s317 + $0x80] sm:$0xff]
          %v1243 = vld [vmem:[%s317 + $0x88] sm:$0xff]
          %v1244 = vld [vmem:[%s317 + $0x90] sm:$0xff]
          %v1245 = vld [vmem:[%s317 + $0x98] sm:$0xff]
          %v1246 = vld [vmem:[%s317 + $0xa0] sm:$0xff]
          %v1247 = vld [vmem:[%s317 + $0xa8] sm:$0xff]
          %v1248 = vld [vmem:[%s317 + $0xb0] sm:$0xff]
          %v1249 = vld [vmem:[%s317 + $0xb8] sm:$0xff]
          %v1250 = vld [vmem:[%s317 + $0xc0] sm:$0xff]
          %v1251 = vld [vmem:[%s317 + $0xc8] sm:$0xff]
          %v1252 = vld [vmem:[%s317 + $0xd0] sm:$0xff]
          %v1253 = vld [vmem:[%s317 + $0xd8] sm:$0xff]
          %v1254 = vld [vmem:[%s317 + $0xe0] sm:$0xff]
          %v1255 = vld [vmem:[%s317 + $0xe8] sm:$0xff]
          %v1256 = vld [vmem:[%s317 + $0xf0] sm:$0xff]
          %v1257 = vld [vmem:[%s317 + $0xf8] sm:$0xff]
          %v1258 = vld [vmem:[%s317 + $0x100] sm:$0xff]
          %v1259 = vld [vmem:[%s317 + $0x108] sm:$0xff]
          %v1260 = vld [vmem:[%s317 + $0x110] sm:$0xff]
          %v1261 = vld [vmem:[%s317 + $0x118] sm:$0xff]
          %v1262 = vld [vmem:[%s317 + $0x120] sm:$0xff]
          %v1263 = vld [vmem:[%s317 + $0x128] sm:$0xff]
          %v1264 = vld [vmem:[%s317 + $0x130] sm:$0xff]
          %v1265 = vld [vmem:[%s317 + $0x138] sm:$0xff]
          %v1266 = vld [vmem:[%s317 + $0x140] sm:$0xff]
          %v1267 = vld [vmem:[%s317 + $0x148] sm:$0xff]
          %v1268 = vld [vmem:[%s317 + $0x150] sm:$0xff]
          %v1269 = vld [vmem:[%s317 + $0x158] sm:$0xff]
          %v1270 = vld [vmem:[%s317 + $0x160] sm:$0xff]
          %v1271 = vld [vmem:[%s317 + $0x168] sm:$0xff]
          %v1272 = vld [vmem:[%s317 + $0x170] sm:$0xff]
          %v1273 = vld [vmem:[%s317 + $0x178] sm:$0xff]
          %v1274 = vld [vmem:[%s317 + $0x180] sm:$0xff]
          %v1275 = vld [vmem:[%s317 + $0x188] sm:$0xff]
          %v1276 = vld [vmem:[%s317 + $0x190] sm:$0xff]
          %v1277 = vld [vmem:[%s317 + $0x198] sm:$0xff]
          %v1278 = vld [vmem:[%s317 + $0x1a0] sm:$0xff]
          %v1279 = vld [vmem:[%s317 + $0x1a8] sm:$0xff]
          %v1280 = vld [vmem:[%s317 + $0x1b0] sm:$0xff]
          %v1281 = vld [vmem:[%s317 + $0x1b8] sm:$0xff]
          %v1282 = vld [vmem:[%s317 + $0x1c0] sm:$0xff]
          %v1283 = vld [vmem:[%s317 + $0x1c8] sm:$0xff]
          %v1284 = vld [vmem:[%s317 + $0x1d0] sm:$0xff]
          %v1285 = vld [vmem:[%s317 + $0x1d8] sm:$0xff]
          %v1286 = vld [vmem:[%s317 + $0x1e0] sm:$0xff]
          %v1287 = vld [vmem:[%s317 + $0x1e8] sm:$0xff]
          %v1288 = vld [vmem:[%s317 + $0x1f0] sm:$0xff]
          %v1289 = vld [vmem:[%s317 + $0x1f8] sm:$0xff]
          %v1290 = vsel %vm1162, 1, 0
          %v1291 = vsel %vm1163, 1, 0
          %v1292 = vsel %vm1164, 1, 0
          %v1293 = vsel %vm1165, 1, 0
          %v1294 = vsel %vm1166, 1, 0
          %v1295 = vsel %vm1167, 1, 0
          %v1296 = vsel %vm1168, 1, 0
          %v1297 = vsel %vm1169, 1, 0
          %v1298 = vsel %vm1170, 1, 0
          %v1299 = vsel %vm1171, 1, 0
          %v1300 = vsel %vm1172, 1, 0
          %v1301 = vsel %vm1173, 1, 0
          %v1302 = vsel %vm1174, 1, 0
          %v1303 = vsel %vm1175, 1, 0
          %v1304 = vsel %vm1176, 1, 0
          %v1305 = vsel %vm1177, 1, 0
          %v1306 = vsel %vm1178, 1, 0
          %v1307 = vsel %vm1179, 1, 0
          %v1308 = vsel %vm1180, 1, 0
          %v1309 = vsel %vm1181, 1, 0
          %v1310 = vsel %vm1182, 1, 0
          %v1311 = vsel %vm1183, 1, 0
          %v1312 = vsel %vm1184, 1, 0
          %v1313 = vsel %vm1185, 1, 0
          %v1314 = vsel %vm1186, 1, 0
          %v1315 = vsel %vm1187, 1, 0
          %v1316 = vsel %vm1188, 1, 0
          %v1317 = vsel %vm1189, 1, 0
          %v1318 = vsel %vm1190, 1, 0
          %v1319 = vsel %vm1191, 1, 0
          %v1320 = vsel %vm1192, 1, 0
          %v1321 = vsel %vm1193, 1, 0
          %v1322 = vsel %vm1194, 1, 0
          %v1323 = vsel %vm1195, 1, 0
          %v1324 = vsel %vm1196, 1, 0
          %v1325 = vsel %vm1197, 1, 0
          %v1326 = vsel %vm1198, 1, 0
          %v1327 = vsel %vm1199, 1, 0
          %v1328 = vsel %vm1200, 1, 0
          %v1329 = vsel %vm1201, 1, 0
          %v1330 = vsel %vm1202, 1, 0
          %v1331 = vsel %vm1203, 1, 0
          %v1332 = vsel %vm1204, 1, 0
          %v1333 = vsel %vm1205, 1, 0
          %v1334 = vsel %vm1206, 1, 0
          %v1335 = vsel %vm1207, 1, 0
          %v1336 = vsel %vm1208, 1, 0
          %v1337 = vsel %vm1209, 1, 0
          %v1338 = vsel %vm1210, 1, 0
          %v1339 = vsel %vm1211, 1, 0
          %v1340 = vsel %vm1212, 1, 0
          %v1341 = vsel %vm1213, 1, 0
          %v1342 = vsel %vm1214, 1, 0
          %v1343 = vsel %vm1215, 1, 0
          %v1344 = vsel %vm1216, 1, 0
          %v1345 = vsel %vm1217, 1, 0
          %v1346 = vsel %vm1218, 1, 0
          %v1347 = vsel %vm1219, 1, 0
          %v1348 = vsel %vm1220, 1, 0
          %v1349 = vsel %vm1221, 1, 0
          %v1350 = vsel %vm1222, 1, 0
          %v1351 = vsel %vm1223, 1, 0
          %v1352 = vsel %vm1224, 1, 0
          %v1353 = vsel %vm1225, 1, 0
          %vm1354 = vcmp.eq.s32.totalorder %v1290, 1
          %vm1355 = vcmp.eq.s32.totalorder %v1291, 1
          %vm1356 = vcmp.eq.s32.totalorder %v1292, 1
          %vm1357 = vcmp.eq.s32.totalorder %v1293, 1
          %vm1358 = vcmp.eq.s32.totalorder %v1294, 1
          %vm1359 = vcmp.eq.s32.totalorder %v1295, 1
          %vm1360 = vcmp.eq.s32.totalorder %v1296, 1
          %vm1361 = vcmp.eq.s32.totalorder %v1297, 1
          %vm1362 = vcmp.eq.s32.totalorder %v1298, 1
          %vm1363 = vcmp.eq.s32.totalorder %v1299, 1
          %vm1364 = vcmp.eq.s32.totalorder %v1300, 1
          %vm1365 = vcmp.eq.s32.totalorder %v1301, 1
          %vm1366 = vcmp.eq.s32.totalorder %v1302, 1
          %vm1367 = vcmp.eq.s32.totalorder %v1303, 1
          %vm1368 = vcmp.eq.s32.totalorder %v1304, 1
          %vm1369 = vcmp.eq.s32.totalorder %v1305, 1
          %vm1370 = vcmp.eq.s32.totalorder %v1306, 1
          %vm1371 = vcmp.eq.s32.totalorder %v1307, 1
          %vm1372 = vcmp.eq.s32.totalorder %v1308, 1
          %vm1373 = vcmp.eq.s32.totalorder %v1309, 1
          %vm1374 = vcmp.eq.s32.totalorder %v1310, 1
          %vm1375 = vcmp.eq.s32.totalorder %v1311, 1
          %vm1376 = vcmp.eq.s32.totalorder %v1312, 1
          %vm1377 = vcmp.eq.s32.totalorder %v1313, 1
          %vm1378 = vcmp.eq.s32.totalorder %v1314, 1
          %vm1379 = vcmp.eq.s32.totalorder %v1315, 1
          %vm1380 = vcmp.eq.s32.totalorder %v1316, 1
          %vm1381 = vcmp.eq.s32.totalorder %v1317, 1
          %vm1382 = vcmp.eq.s32.totalorder %v1318, 1
          %vm1383 = vcmp.eq.s32.totalorder %v1319, 1
          %vm1384 = vcmp.eq.s32.totalorder %v1320, 1
          %vm1385 = vcmp.eq.s32.totalorder %v1321, 1
          %vm1386 = vcmp.eq.s32.totalorder %v1322, 1
          %vm1387 = vcmp.eq.s32.totalorder %v1323, 1
          %vm1388 = vcmp.eq.s32.totalorder %v1324, 1
          %vm1389 = vcmp.eq.s32.totalorder %v1325, 1
          %vm1390 = vcmp.eq.s32.totalorder %v1326, 1
          %vm1391 = vcmp.eq.s32.totalorder %v1327, 1
          %vm1392 = vcmp.eq.s32.totalorder %v1328, 1
          %vm1393 = vcmp.eq.s32.totalorder %v1329, 1
          %vm1394 = vcmp.eq.s32.totalorder %v1330, 1
          %vm1395 = vcmp.eq.s32.totalorder %v1331, 1
          %vm1396 = vcmp.eq.s32.totalorder %v1332, 1
          %vm1397 = vcmp.eq.s32.totalorder %v1333, 1
          %vm1398 = vcmp.eq.s32.totalorder %v1334, 1
          %vm1399 = vcmp.eq.s32.totalorder %v1335, 1
          %vm1400 = vcmp.eq.s32.totalorder %v1336, 1
          %vm1401 = vcmp.eq.s32.totalorder %v1337, 1
          %vm1402 = vcmp.eq.s32.totalorder %v1338, 1
          %vm1403 = vcmp.eq.s32.totalorder %v1339, 1
          %vm1404 = vcmp.eq.s32.totalorder %v1340, 1
          %vm1405 = vcmp.eq.s32.totalorder %v1341, 1
          %vm1406 = vcmp.eq.s32.totalorder %v1342, 1
          %vm1407 = vcmp.eq.s32.totalorder %v1343, 1
          %vm1408 = vcmp.eq.s32.totalorder %v1344, 1
          %vm1409 = vcmp.eq.s32.totalorder %v1345, 1
          %vm1410 = vcmp.eq.s32.totalorder %v1346, 1
          %vm1411 = vcmp.eq.s32.totalorder %v1347, 1
          %vm1412 = vcmp.eq.s32.totalorder %v1348, 1
          %vm1413 = vcmp.eq.s32.totalorder %v1349, 1
          %vm1414 = vcmp.eq.s32.totalorder %v1350, 1
          %vm1415 = vcmp.eq.s32.totalorder %v1351, 1
          %vm1416 = vcmp.eq.s32.totalorder %v1352, 1
          %vm1417 = vcmp.eq.s32.totalorder %v1353, 1
          %v1418 = vsel %vm1354, %v735, %v1226
          %v1419 = vsel %vm1355, %v737, %v1227
          %v1420 = vsel %vm1356, %v740, %v1228
          %v1421 = vsel %vm1357, %v742, %v1229
          %v1422 = vsel %vm1358, %v745, %v1230
          %v1423 = vsel %vm1359, %v747, %v1231
          %v1424 = vsel %vm1360, %v750, %v1232
          %v1425 = vsel %vm1361, %v752, %v1233
          %v1426 = vsel %vm1362, %v755, %v1234
          %v1427 = vsel %vm1363, %v757, %v1235
          %v1428 = vsel %vm1364, %v760, %v1236
          %v1429 = vsel %vm1365, %v762, %v1237
          %v1430 = vsel %vm1366, %v765, %v1238
          %v1431 = vsel %vm1367, %v767, %v1239
          %v1432 = vsel %vm1368, %v770, %v1240
          %v1433 = vsel %vm1369, %v772, %v1241
          %v1434 = vsel %vm1370, %v775, %v1242
          %v1435 = vsel %vm1371, %v777, %v1243
          %v1436 = vsel %vm1372, %v780, %v1244
          %v1437 = vsel %vm1373, %v782, %v1245
          %v1438 = vsel %vm1374, %v785, %v1246
          %v1439 = vsel %vm1375, %v787, %v1247
          %v1440 = vsel %vm1376, %v790, %v1248
          %v1441 = vsel %vm1377, %v792, %v1249
          %v1442 = vsel %vm1378, %v795, %v1250
          %v1443 = vsel %vm1379, %v797, %v1251
          %v1444 = vsel %vm1380, %v800, %v1252
          %v1445 = vsel %vm1381, %v802, %v1253
          %v1446 = vsel %vm1382, %v805, %v1254
          %v1447 = vsel %vm1383, %v807, %v1255
          %v1448 = vsel %vm1384, %v810, %v1256
          %v1449 = vsel %vm1385, %v812, %v1257
          %v1450 = vsel %vm1386, %v815, %v1258
          %v1451 = vsel %vm1387, %v817, %v1259
          %v1452 = vsel %vm1388, %v820, %v1260
          %v1453 = vsel %vm1389, %v822, %v1261
          %v1454 = vsel %vm1390, %v825, %v1262
          %v1455 = vsel %vm1391, %v827, %v1263
          %v1456 = vsel %vm1392, %v830, %v1264
          %v1457 = vsel %vm1393, %v832, %v1265
          %v1458 = vsel %vm1394, %v835, %v1266
          %v1459 = vsel %vm1395, %v837, %v1267
          %v1460 = vsel %vm1396, %v840, %v1268
          %v1461 = vsel %vm1397, %v842, %v1269
          %v1462 = vsel %vm1398, %v845, %v1270
          %v1463 = vsel %vm1399, %v847, %v1271
          %v1464 = vsel %vm1400, %v850, %v1272
          %v1465 = vsel %vm1401, %v852, %v1273
          %v1466 = vsel %vm1402, %v855, %v1274
          %v1467 = vsel %vm1403, %v857, %v1275
          %v1468 = vsel %vm1404, %v860, %v1276
          %v1469 = vsel %vm1405, %v862, %v1277
          %v1470 = vsel %vm1406, %v865, %v1278
          %v1471 = vsel %vm1407, %v867, %v1279
          %v1472 = vsel %vm1408, %v870, %v1280
          %v1473 = vsel %vm1409, %v872, %v1281
          %v1474 = vsel %vm1410, %v875, %v1282
          %v1475 = vsel %vm1411, %v877, %v1283
          %v1476 = vsel %vm1412, %v880, %v1284
          %v1477 = vsel %vm1413, %v882, %v1285
          %v1478 = vsel %vm1414, %v885, %v1286
          %v1479 = vsel %vm1415, %v887, %v1287
          %v1480 = vsel %vm1416, %v890, %v1288
          %v1481 = vsel %vm1417, %v892, %v1289
          %1482 = vst [vmem:[%s317] sm:$0xff] %v1418
          %1483 = vst [vmem:[%s317 + $0x8] sm:$0xff] %v1419
          %1484 = vst [vmem:[%s317 + $0x10] sm:$0xff] %v1420
          %1485 = vst [vmem:[%s317 + $0x18] sm:$0xff] %v1421
          %1486 = vst [vmem:[%s317 + $0x20] sm:$0xff] %v1422
          %1487 = vst [vmem:[%s317 + $0x28] sm:$0xff] %v1423
          %1488 = vst [vmem:[%s317 + $0x30] sm:$0xff] %v1424
          %1489 = vst [vmem:[%s317 + $0x38] sm:$0xff] %v1425
          %1490 = vst [vmem:[%s317 + $0x40] sm:$0xff] %v1426
          %1491 = vst [vmem:[%s317 + $0x48] sm:$0xff] %v1427
          %1492 = vst [vmem:[%s317 + $0x50] sm:$0xff] %v1428
          %1493 = vst [vmem:[%s317 + $0x58] sm:$0xff] %v1429
          %1494 = vst [vmem:[%s317 + $0x60] sm:$0xff] %v1430
          %1495 = vst [vmem:[%s317 + $0x68] sm:$0xff] %v1431
          %1496 = vst [vmem:[%s317 + $0x70] sm:$0xff] %v1432
          %1497 = vst [vmem:[%s317 + $0x78] sm:$0xff] %v1433
          %1498 = vst [vmem:[%s317 + $0x80] sm:$0xff] %v1434
          %1499 = vst [vmem:[%s317 + $0x88] sm:$0xff] %v1435
          %1500 = vst [vmem:[%s317 + $0x90] sm:$0xff] %v1436
          %1501 = vst [vmem:[%s317 + $0x98] sm:$0xff] %v1437
          %1502 = vst [vmem:[%s317 + $0xa0] sm:$0xff] %v1438
          %1503 = vst [vmem:[%s317 + $0xa8] sm:$0xff] %v1439
          %1504 = vst [vmem:[%s317 + $0xb0] sm:$0xff] %v1440
          %1505 = vst [vmem:[%s317 + $0xb8] sm:$0xff] %v1441
          %1506 = vst [vmem:[%s317 + $0xc0] sm:$0xff] %v1442
          %1507 = vst [vmem:[%s317 + $0xc8] sm:$0xff] %v1443
          %1508 = vst [vmem:[%s317 + $0xd0] sm:$0xff] %v1444
          %1509 = vst [vmem:[%s317 + $0xd8] sm:$0xff] %v1445
          %1510 = vst [vmem:[%s317 + $0xe0] sm:$0xff] %v1446
          %1511 = vst [vmem:[%s317 + $0xe8] sm:$0xff] %v1447
          %1512 = vst [vmem:[%s317 + $0xf0] sm:$0xff] %v1448
          %1513 = vst [vmem:[%s317 + $0xf8] sm:$0xff] %v1449
          %1514 = vst [vmem:[%s317 + $0x100] sm:$0xff] %v1450
          %1515 = vst [vmem:[%s317 + $0x108] sm:$0xff] %v1451
          %1516 = vst [vmem:[%s317 + $0x110] sm:$0xff] %v1452
          %1517 = vst [vmem:[%s317 + $0x118] sm:$0xff] %v1453
          %1518 = vst [vmem:[%s317 + $0x120] sm:$0xff] %v1454
          %1519 = vst [vmem:[%s317 + $0x128] sm:$0xff] %v1455
          %1520 = vst [vmem:[%s317 + $0x130] sm:$0xff] %v1456
          %1521 = vst [vmem:[%s317 + $0x138] sm:$0xff] %v1457
          %1522 = vst [vmem:[%s317 + $0x140] sm:$0xff] %v1458
          %1523 = vst [vmem:[%s317 + $0x148] sm:$0xff] %v1459
          %1524 = vst [vmem:[%s317 + $0x150] sm:$0xff] %v1460
          %1525 = vst [vmem:[%s317 + $0x158] sm:$0xff] %v1461
          %1526 = vst [vmem:[%s317 + $0x160] sm:$0xff] %v1462
          %1527 = vst [vmem:[%s317 + $0x168] sm:$0xff] %v1463
          %1528 = vst [vmem:[%s317 + $0x170] sm:$0xff] %v1464
          %1529 = vst [vmem:[%s317 + $0x178] sm:$0xff] %v1465
          %1530 = vst [vmem:[%s317 + $0x180] sm:$0xff] %v1466
          %1531 = vst [vmem:[%s317 + $0x188] sm:$0xff] %v1467
          %1532 = vst [vmem:[%s317 + $0x190] sm:$0xff] %v1468
          %1533 = vst [vmem:[%s317 + $0x198] sm:$0xff] %v1469
          %1534 = vst [vmem:[%s317 + $0x1a0] sm:$0xff] %v1470
          %1535 = vst [vmem:[%s317 + $0x1a8] sm:$0xff] %v1471
          %1536 = vst [vmem:[%s317 + $0x1b0] sm:$0xff] %v1472
          %1537 = vst [vmem:[%s317 + $0x1b8] sm:$0xff] %v1473
          %1538 = vst [vmem:[%s317 + $0x1c0] sm:$0xff] %v1474
          %1539 = vst [vmem:[%s317 + $0x1c8] sm:$0xff] %v1475
          %1540 = vst [vmem:[%s317 + $0x1d0] sm:$0xff] %v1476
          %1541 = vst [vmem:[%s317 + $0x1d8] sm:$0xff] %v1477
          %1542 = vst [vmem:[%s317 + $0x1e0] sm:$0xff] %v1478
          %1543 = vst [vmem:[%s317 + $0x1e8] sm:$0xff] %v1479
          %1544 = vst [vmem:[%s317 + $0x1f0] sm:$0xff] %v1480
          %1545 = vst [vmem:[%s317 + $0x1f8] sm:$0xff] %v1481
        $region48: #{module_selector_forward.1} parent=39 // pred_fallthru
          _
      $region40: #{module_selector_forward.1} parent=31 // pred_fallthru
        _
      %s1546 = smul.u32 %s52, 5
      %s1547 = sadd.s32 %s1546, %s54
      %s1548 = sld [smem:[#allocation3 + %s1547]]
      %s1549 = smul.u32 64, %s1548
      %p1550 = scmp.lt.s32.totalorder %s1549, 191
      %s1551 = scalar_select %p1550, %s1549, 191
      %p1552 = scmp.lt.s32.totalorder %s53, 0
      %s1553 = scalar_select %p1552, %s53, 0
      %s1554 = sadd.s32 %s1553, %s1551
      %s1555 = smul.addr %s1554, 8
      %s1556 = scalar_lea.vmem %s8, %s1555
      // Predicated region
      $region49: #{module_selector_forward.1} parent=31 // pred_check
        %p1557 = pneg %p179
      $region50: #{module_selector_forward.1} parent=31 // pred_check_branch
        %1559 = sbr.rel (%p1557) target = $region52
      $region51: #{module_selector_forward.1} parent=31 // pred_region
        %s1560 = smul.u32 %s52, 5
        %s1561 = sadd.s32 %s1560, %s54
        %s1562 = sld [smem:[#allocation3 + %s1561]]
        %s1563 = smul.u32 64, %s1562
      $region52: #{module_selector_forward.1} parent=31 // pred_fallthru
        _
    $region32: #{module_selector_forward.1} parent=5 // pred_fallthru
      _
    %p1564 = scmp.le.s32.totalorder 2, %s42
    // Predicated region
    $region53: #{module_selector_forward.1} parent=5 // pred_check
      %p1565 = pneg %p1564
    $region54: #{module_selector_forward.1} parent=5 // pred_check_branch
      %1567 = sbr.rel (%p1565) target = $region56
    $region55: #{module_selector_forward.1} parent=5 // pred_region
      %s1568 = ssub.s32 %s42, 2
      // Predicated region
      $region57: #{module_selector_forward.1} parent=55 // pred_check
        %p1569 = pneg %p185
      $region58: #{module_selector_forward.1} parent=55 // pred_check_branch
        %1571 = sbr.rel (%p1569) target = $region60
      $region59: #{module_selector_forward.1} parent=55 // pred_region
        %s1572 = smul.u32 %s55, 5
        %s1573 = sadd.s32 %s1572, %s57
        %s1574 = sld [smem:[#allocation3 + %s1573]]
        %s1575 = smul.u32 64, %s1574
        %p1576 = scmp.lt.s32.totalorder %s1575, 191
        %s1577 = scalar_select %p1576, %s1575, 191
        %p1578 = scmp.lt.s32.totalorder %s56, 0
        %s1579 = scalar_select %p1578, %s56, 0
        %s1580 = sadd.s32 %s1579, %s1577
        %s1581 = smul.addr %s1580, 8
        %s1582 = scalar_lea.vmem %s8, %s1581
      $region60: #{module_selector_forward.1} parent=55 // pred_fallthru
        _
    $region56: #{module_selector_forward.1} parent=5 // pred_fallthru
      _
  $region6: #{module_selector_forward.1} parent=0 // loop_footer
    %s46 = sadd.s32 1, %s42
  $region7: #{module_selector_forward.1} parent=0 // loop_footer_branch
    %41 = sbr.rel target = $region3
  $region8: #{module_selector_forward.1} parent=0 // loop_exit
    _

</llo_original>
